<compile_context>
chip_gen: v7x
topology: tpu7x:2x2x1
jax: 0.10.0
libtpu: 0.0.40
codegen_flags: <defaults>
</compile_context>

<pallas_src>
import functools

import jax
import jax.numpy as jnp
from jax.experimental import pallas as pl
from jax.experimental.pallas import tpu as pltpu

BN_EPS = 1e-5


def _round_up(x, m):
    return ((x + m - 1) // m) * m


def graphdnet_kernel(x_ref, w_ref, g_ref, be_ref, wf_ref, bf_ref, o_ref, *,
                     compute_dtype):
    """Fused forward.

    x_ref : (N, nh)       compute_dtype
    w_ref : (L, nh, nh)   compute_dtype   (hidden weights, no biases: BN cancels them)
    g_ref : (L, 1, nh)    f32             (BN gamma)
    be_ref: (L, 1, nh)    f32             (BN beta)
    wf_ref: (nh, ndp)     compute_dtype   (final weight, lane-padded)
    bf_ref: (1, ndp)      f32             (final bias, lane-padded)
    o_ref : (N, ndp)      f32
    """
    h = x_ref[...]                       # already compute_dtype (cast wrapper-side)
    n_layers = w_ref.shape[0]
    nh = w_ref.shape[2]
    n_rows = x_ref.shape[0]
    inv_n = jnp.float32(1.0 / n_rows)
    # Hoisted once (JAX does not CSE broadcasts); reused by every layer's
    # MXU-based column-sum reduction.
    ones_row = jnp.ones((1, n_rows), jnp.float32)

    for i in range(n_layers):            # static unroll over the 5 hidden layers
        # Linear (bias-free), f32 accumulation on the MXU.
        y = jnp.dot(h.astype(compute_dtype), w_ref[i],
                    preferred_element_type=jnp.float32)
        # BN batch stats via one ones-matmul on the MXU: column sums of
        # [y | y*y] give sum and sum-of-squares in a single pass.
        yy = jnp.concatenate([y, y * y], axis=1)                   # (N, 2*nh)
        sums = jnp.dot(ones_row, yy, preferred_element_type=jnp.float32)  # (1, 2*nh)
        mean = sums[:, :nh] * inv_n
        var = jnp.maximum(sums[:, nh:] * inv_n - mean * mean, 0.0)  # clamp >= 0
        # Fold train-mode BN into a single scale/shift; rsqrt goes to the EUP.
        scale = g_ref[i] * jax.lax.rsqrt(var + BN_EPS)
        shift = be_ref[i] - mean * scale
        h = jnp.maximum(y * scale + shift, 0.0)                     # BN + ReLU, f32

    # Final linear (with bias), lane-padded so the store is an unmasked vst.
    out = jnp.dot(h.astype(compute_dtype), wf_ref[...],
                  preferred_element_type=jnp.float32) + bf_ref[...]
    o_ref[...] = out.astype(o_ref.dtype)


def _vmem_limit_bytes():
    """~75% of physical VMEM for this generation (48 MiB on v7x, 96 MiB on v5e/v6e)."""
    try:
        cap = pltpu.get_tpu_info().vmem_capacity_bytes
    except Exception:
        cap = 64 << 20  # conservative fallback (v7x-sized)
    return int(cap * 3 // 4)


def prepare_params(params, *, compute_dtype=jnp.float32):
    """One-time packing of module parameters for the kernel.

    Hidden-layer biases b3..b7 are intentionally dropped: train-mode BN mean
    subtraction cancels them exactly. Returns (packed_dict, nd_out).
    """
    names = ("3", "4", "5", "6", "7")
    nh = params["w3"].shape[0]
    nd_out = params["wf"].shape[1]
    ndp = _round_up(nd_out, 128)                    # lane-dense padded output width
    packed = {
        "w": jnp.stack([params["w" + n] for n in names]).astype(compute_dtype),
        "gamma": jnp.stack([params["g" + n] for n in names]).astype(jnp.float32),
        "beta": jnp.stack([params["be" + n] for n in names]).astype(jnp.float32),
        "wf": jnp.zeros((nh, ndp), compute_dtype).at[:, :nd_out].set(
            params["wf"].astype(compute_dtype)),
        "bf": jnp.zeros((1, ndp), jnp.float32).at[:, :nd_out].set(
            params["bf"].astype(jnp.float32)),
    }
    return packed, nd_out


@functools.partial(jax.jit, static_argnames=("nd_out",))
def graphdnet_forward(x, packed, *, nd_out):
    """x: (N, nh) or (T, B, nh); packed: output of prepare_params."""
    compute_dtype = packed["w"].dtype
    re = x.ndim == 3
    if re:
        T, B, C = x.shape
        x2 = x.reshape(T * B, C)
    else:
        x2 = x
    N, nh = x2.shape
    L = packed["w"].shape[0]
    ndp = packed["wf"].shape[1]
    x_c = x2.astype(compute_dtype)

    flat_args = [x_c, packed["w"], packed["gamma"], packed["beta"],
                 packed["wf"], packed["bf"]]

    io_bytes = sum(int(a.size) * a.dtype.itemsize for a in flat_args) + N * ndp * 4
    flops = (2 * N * nh * nh * L          # hidden matmuls
             + 2 * N * (2 * nh) * L       # ones-matmul BN reductions
             + 2 * N * nh * ndp)          # final matmul
    cost = pl.CostEstimate(flops=flops, transcendentals=L * nh,
                           bytes_accessed=io_bytes)

    vspec = pl.BlockSpec(memory_space=pltpu.MemorySpace.VMEM)
    kernel = functools.partial(graphdnet_kernel, compute_dtype=compute_dtype)
    out_p = pl.pallas_call(
        kernel,
        out_shape=jax.ShapeDtypeStruct((N, ndp), jnp.float32),
        in_specs=[vspec] * len(flat_args),
        out_specs=vspec,
        compiler_params=pltpu.CompilerParams(vmem_limit_bytes=_vmem_limit_bytes()),
        cost_estimate=cost,
    )(*flat_args)

    out = out_p[:, :nd_out]
    if re:
        return out.reshape(T, B, nd_out)
    return out


def init_params(key, nh, nd_out):
    """Deterministic PyTorch-like init (uniform +/- 1/sqrt(fan_in)).

    Hidden-layer biases b3..b7 are kept (module fidelity) and used by the
    reference; the kernel omits them since train-mode BN cancels them exactly."""
    params = {}
    names = ["3", "4", "5", "6", "7"]
    dims = [(nh, nh)] * 5
    keys = jax.random.split(key, 2 * (len(names) + 1))
    for i, (name, (din, dout)) in enumerate(zip(names, dims)):
        bound = 1.0 / jnp.sqrt(din)
        params["w" + name] = jax.random.uniform(
            keys[2 * i], (din, dout), jnp.float32, -bound, bound)
        params["b" + name] = jax.random.uniform(
            keys[2 * i + 1], (1, dout), jnp.float32, -bound, bound)
        params["g" + name] = jnp.ones((1, dout), jnp.float32)    # BN weight
        params["be" + name] = jnp.zeros((1, dout), jnp.float32)  # BN bias
    bound = 1.0 / jnp.sqrt(nh)
    params["wf"] = jax.random.uniform(
        keys[-2], (nh, nd_out), jnp.float32, -bound, bound)
    params["bf"] = jax.random.uniform(
        keys[-1], (1, nd_out), jnp.float32, -bound, bound)
    return params


def _reference_forward(x, params, compute_dtype=jnp.float32):
    """Plain-JAX reference of the PyTorch forward (includes the hidden-layer
    biases and two-pass variance, i.e. the literal module semantics)."""
    re = x.ndim == 3
    if re:
        T, B, C = x.shape
        h = x.reshape(T * B, C)
    else:
        h = x
    for name in ("3", "4", "5", "6", "7"):
        y = jnp.dot(h.astype(compute_dtype),
                    params["w" + name].astype(compute_dtype),
                    preferred_element_type=jnp.float32)
        y = y + params["b" + name]
        mean = jnp.mean(y, axis=0, keepdims=True)
        var = jnp.mean((y - mean) ** 2, axis=0, keepdims=True)
        y = (y - mean) / jnp.sqrt(var + BN_EPS)
        h = jnp.maximum(y * params["g" + name] + params["be" + name], 0.0)
    out = jnp.dot(h.astype(compute_dtype),
                  params["wf"].astype(compute_dtype),
                  preferred_element_type=jnp.float32) + params["bf"]
    if re:
        return out.reshape(T, B, -1)
    return out


if __name__ == "__main__":
    nh = 32        # opt.nh
    nd_out = 8     # opt.nd_out
    T, B = 8, 2    # 3-D input path: (T, B, nh) -> flattened to (T*B, nh)

    key = jax.random.PRNGKey(0)
    k_x, k_p = jax.random.split(key)
    x = jax.random.normal(k_x, (T, B, nh), jnp.float32)
    params = init_params(k_p, nh, nd_out)

    # f32 compute path (matches PyTorch fp32 semantics; recommended on v5e).
    packed_f32, nd = prepare_params(params, compute_dtype=jnp.float32)
    out = jax.block_until_ready(graphdnet_forward(x, packed_f32, nd_out=nd))
    ref = _reference_forward(x, params)
    assert out.shape == (T, B, nd_out), out.shape
    assert jnp.allclose(out, ref, atol=2e-4, rtol=2e-4), \
        float(jnp.max(jnp.abs(out - ref)))

    # bf16-matmul path (recommended default on the bf16-native MXUs of v6e/v7x;
    # accumulation and BN math stay f32).
    packed_bf16, nd = prepare_params(params, compute_dtype=jnp.bfloat16)
    out_bf = jax.block_until_ready(graphdnet_forward(x, packed_bf16, nd_out=nd))
    ref_bf = _reference_forward(x, params, compute_dtype=jnp.bfloat16)
    assert out_bf.shape == (T, B, nd_out), out_bf.shape
    assert jnp.allclose(out_bf, ref_bf, atol=3e-2, rtol=3e-2), \
        float(jnp.max(jnp.abs(out_bf - ref_bf)))

    print("KERNEL_OK")
</pallas_src>

<mosaic_0001>
module attributes {stable_mosaic.version = 11 : i64} {
  func.func @graphdnet_kernel(%arg0: memref<16x32xf32, #tpu.memory_space<vmem>>, %arg1: memref<5x32x32xf32, #tpu.memory_space<vmem>>, %arg2: memref<5x1x32xf32, #tpu.memory_space<vmem>>, %arg3: memref<5x1x32xf32, #tpu.memory_space<vmem>>, %arg4: memref<32x128xf32, #tpu.memory_space<vmem>>, %arg5: memref<1x128xf32, #tpu.memory_space<vmem>>, %arg6: memref<16x128xf32, #tpu.memory_space<vmem>>) attributes {dimension_semantics = [], scalar_prefetch = 0 : i64, scratch_operands = 0 : i64, tpu.core_type = #tpu.core_type<tc>} {
    %c0 = arith.constant 0 : index
    %c0_0 = arith.constant 0 : index
    %0 = vector.load %arg0[%c0, %c0_0] : memref<16x32xf32, #tpu.memory_space<vmem>>, vector<16x32xf32>
    %cst = arith.constant 1.000000e+00 : f32
    %1 = vector.broadcast %cst : f32 to vector<1x16xf32>
    %c0_1 = arith.constant 0 : index
    %c0_2 = arith.constant 0 : index
    %c0_3 = arith.constant 0 : index
    %2 = vector.load %arg1[%c0_1, %c0_2, %c0_3] : memref<5x32x32xf32, #tpu.memory_space<vmem>>, vector<1x32x32xf32>
    %3 = vector.shape_cast %2 : vector<1x32x32xf32> to vector<32x32xf32>
    %cst_4 = arith.constant dense<0.000000e+00> : vector<16x32xf32>
    %4 = tpu.matmul %0, %3, %cst_4 {dimension_numbers = #tpu.dot_dimension_numbers<[1], [0], [0], [1], [0, 0, 1, 1], [], []>} : vector<16x32xf32>, vector<32x32xf32>, vector<16x32xf32> -> vector<16x32xf32>
    %5 = arith.mulf %4, %4 : vector<16x32xf32>
    %6 = tpu.concatenate %4, %5 in 1 : vector<16x32xf32>, vector<16x32xf32> -> vector<16x64xf32>
    %cst_5 = arith.constant dense<0.000000e+00> : vector<1x64xf32>
    %7 = tpu.matmul %1, %6, %cst_5 {dimension_numbers = #tpu.dot_dimension_numbers<[1], [0], [0], [1], [0, 0, 1, 1], [], []>} : vector<1x16xf32>, vector<16x64xf32>, vector<1x64xf32> -> vector<1x64xf32>
    %8 = vector.extract_strided_slice %7 {offsets = [0, 0], sizes = [1, 32], strides = [1, 1]} : vector<1x64xf32> to vector<1x32xf32>
    %cst_6 = arith.constant 6.250000e-02 : f32
    %9 = vector.broadcast %cst_6 : f32 to vector<1x32xf32>
    %10 = arith.mulf %8, %9 : vector<1x32xf32>
    %11 = vector.extract_strided_slice %7 {offsets = [0, 32], sizes = [1, 32], strides = [1, 1]} : vector<1x64xf32> to vector<1x32xf32>
    %cst_7 = arith.constant 6.250000e-02 : f32
    %12 = vector.broadcast %cst_7 : f32 to vector<1x32xf32>
    %13 = arith.mulf %11, %12 : vector<1x32xf32>
    %14 = arith.mulf %10, %10 : vector<1x32xf32>
    %15 = arith.subf %13, %14 : vector<1x32xf32>
    %cst_8 = arith.constant 0.000000e+00 : f32
    %16 = vector.broadcast %cst_8 : f32 to vector<1x32xf32>
    %17 = arith.maximumf %15, %16 : vector<1x32xf32>
    %c0_9 = arith.constant 0 : index
    %c0_10 = arith.constant 0 : index
    %c0_11 = arith.constant 0 : index
    %18 = vector.load %arg2[%c0_9, %c0_10, %c0_11] : memref<5x1x32xf32, #tpu.memory_space<vmem>>, vector<1x1x32xf32>
    %19 = vector.shape_cast %18 : vector<1x1x32xf32> to vector<1x32xf32>
    %cst_12 = arith.constant 9.99999974E-6 : f32
    %20 = vector.broadcast %cst_12 : f32 to vector<1x32xf32>
    %21 = arith.addf %17, %20 : vector<1x32xf32>
    %22 = math.rsqrt %21 : vector<1x32xf32>
    %23 = arith.mulf %19, %22 : vector<1x32xf32>
    %c0_13 = arith.constant 0 : index
    %c0_14 = arith.constant 0 : index
    %c0_15 = arith.constant 0 : index
    %24 = vector.load %arg3[%c0_13, %c0_14, %c0_15] : memref<5x1x32xf32, #tpu.memory_space<vmem>>, vector<1x1x32xf32>
    %25 = vector.shape_cast %24 : vector<1x1x32xf32> to vector<1x32xf32>
    %26 = arith.mulf %10, %23 : vector<1x32xf32>
    %27 = arith.subf %25, %26 : vector<1x32xf32>
    %28 = vector.broadcast %23 : vector<1x32xf32> to vector<16x32xf32>
    %29 = arith.mulf %4, %28 : vector<16x32xf32>
    %30 = vector.broadcast %27 : vector<1x32xf32> to vector<16x32xf32>
    %31 = arith.addf %29, %30 : vector<16x32xf32>
    %cst_16 = arith.constant 0.000000e+00 : f32
    %32 = vector.broadcast %cst_16 : f32 to vector<16x32xf32>
    %33 = arith.maximumf %31, %32 : vector<16x32xf32>
    %c1 = arith.constant 1 : index
    %c0_17 = arith.constant 0 : index
    %c0_18 = arith.constant 0 : index
    %34 = vector.load %arg1[%c1, %c0_17, %c0_18] : memref<5x32x32xf32, #tpu.memory_space<vmem>>, vector<1x32x32xf32>
    %35 = vector.shape_cast %34 : vector<1x32x32xf32> to vector<32x32xf32>
    %cst_19 = arith.constant dense<0.000000e+00> : vector<16x32xf32>
    %36 = tpu.matmul %33, %35, %cst_19 {dimension_numbers = #tpu.dot_dimension_numbers<[1], [0], [0], [1], [0, 0, 1, 1], [], []>} : vector<16x32xf32>, vector<32x32xf32>, vector<16x32xf32> -> vector<16x32xf32>
    %37 = arith.mulf %36, %36 : vector<16x32xf32>
    %38 = tpu.concatenate %36, %37 in 1 : vector<16x32xf32>, vector<16x32xf32> -> vector<16x64xf32>
    %cst_20 = arith.constant dense<0.000000e+00> : vector<1x64xf32>
    %39 = tpu.matmul %1, %38, %cst_20 {dimension_numbers = #tpu.dot_dimension_numbers<[1], [0], [0], [1], [0, 0, 1, 1], [], []>} : vector<1x16xf32>, vector<16x64xf32>, vector<1x64xf32> -> vector<1x64xf32>
    %40 = vector.extract_strided_slice %39 {offsets = [0, 0], sizes = [1, 32], strides = [1, 1]} : vector<1x64xf32> to vector<1x32xf32>
    %cst_21 = arith.constant 6.250000e-02 : f32
    %41 = vector.broadcast %cst_21 : f32 to vector<1x32xf32>
    %42 = arith.mulf %40, %41 : vector<1x32xf32>
    %43 = vector.extract_strided_slice %39 {offsets = [0, 32], sizes = [1, 32], strides = [1, 1]} : vector<1x64xf32> to vector<1x32xf32>
    %cst_22 = arith.constant 6.250000e-02 : f32
    %44 = vector.broadcast %cst_22 : f32 to vector<1x32xf32>
    %45 = arith.mulf %43, %44 : vector<1x32xf32>
    %46 = arith.mulf %42, %42 : vector<1x32xf32>
    %47 = arith.subf %45, %46 : vector<1x32xf32>
    %cst_23 = arith.constant 0.000000e+00 : f32
    %48 = vector.broadcast %cst_23 : f32 to vector<1x32xf32>
    %49 = arith.maximumf %47, %48 : vector<1x32xf32>
    %c1_24 = arith.constant 1 : index
    %c0_25 = arith.constant 0 : index
    %c0_26 = arith.constant 0 : index
    %50 = vector.load %arg2[%c1_24, %c0_25, %c0_26] : memref<5x1x32xf32, #tpu.memory_space<vmem>>, vector<1x1x32xf32>
    %51 = vector.shape_cast %50 : vector<1x1x32xf32> to vector<1x32xf32>
    %cst_27 = arith.constant 9.99999974E-6 : f32
    %52 = vector.broadcast %cst_27 : f32 to vector<1x32xf32>
    %53 = arith.addf %49, %52 : vector<1x32xf32>
    %54 = math.rsqrt %53 : vector<1x32xf32>
    %55 = arith.mulf %51, %54 : vector<1x32xf32>
    %c1_28 = arith.constant 1 : index
    %c0_29 = arith.constant 0 : index
    %c0_30 = arith.constant 0 : index
    %56 = vector.load %arg3[%c1_28, %c0_29, %c0_30] : memref<5x1x32xf32, #tpu.memory_space<vmem>>, vector<1x1x32xf32>
    %57 = vector.shape_cast %56 : vector<1x1x32xf32> to vector<1x32xf32>
    %58 = arith.mulf %42, %55 : vector<1x32xf32>
    %59 = arith.subf %57, %58 : vector<1x32xf32>
    %60 = vector.broadcast %55 : vector<1x32xf32> to vector<16x32xf32>
    %61 = arith.mulf %36, %60 : vector<16x32xf32>
    %62 = vector.broadcast %59 : vector<1x32xf32> to vector<16x32xf32>
    %63 = arith.addf %61, %62 : vector<16x32xf32>
    %cst_31 = arith.constant 0.000000e+00 : f32
    %64 = vector.broadcast %cst_31 : f32 to vector<16x32xf32>
    %65 = arith.maximumf %63, %64 : vector<16x32xf32>
    %c2 = arith.constant 2 : index
    %c0_32 = arith.constant 0 : index
    %c0_33 = arith.constant 0 : index
    %66 = vector.load %arg1[%c2, %c0_32, %c0_33] : memref<5x32x32xf32, #tpu.memory_space<vmem>>, vector<1x32x32xf32>
    %67 = vector.shape_cast %66 : vector<1x32x32xf32> to vector<32x32xf32>
    %cst_34 = arith.constant dense<0.000000e+00> : vector<16x32xf32>
    %68 = tpu.matmul %65, %67, %cst_34 {dimension_numbers = #tpu.dot_dimension_numbers<[1], [0], [0], [1], [0, 0, 1, 1], [], []>} : vector<16x32xf32>, vector<32x32xf32>, vector<16x32xf32> -> vector<16x32xf32>
    %69 = arith.mulf %68, %68 : vector<16x32xf32>
    %70 = tpu.concatenate %68, %69 in 1 : vector<16x32xf32>, vector<16x32xf32> -> vector<16x64xf32>
    %cst_35 = arith.constant dense<0.000000e+00> : vector<1x64xf32>
    %71 = tpu.matmul %1, %70, %cst_35 {dimension_numbers = #tpu.dot_dimension_numbers<[1], [0], [0], [1], [0, 0, 1, 1], [], []>} : vector<1x16xf32>, vector<16x64xf32>, vector<1x64xf32> -> vector<1x64xf32>
    %72 = vector.extract_strided_slice %71 {offsets = [0, 0], sizes = [1, 32], strides = [1, 1]} : vector<1x64xf32> to vector<1x32xf32>
    %cst_36 = arith.constant 6.250000e-02 : f32
    %73 = vector.broadcast %cst_36 : f32 to vector<1x32xf32>
    %74 = arith.mulf %72, %73 : vector<1x32xf32>
    %75 = vector.extract_strided_slice %71 {offsets = [0, 32], sizes = [1, 32], strides = [1, 1]} : vector<1x64xf32> to vector<1x32xf32>
    %cst_37 = arith.constant 6.250000e-02 : f32
    %76 = vector.broadcast %cst_37 : f32 to vector<1x32xf32>
    %77 = arith.mulf %75, %76 : vector<1x32xf32>
    %78 = arith.mulf %74, %74 : vector<1x32xf32>
    %79 = arith.subf %77, %78 : vector<1x32xf32>
    %cst_38 = arith.constant 0.000000e+00 : f32
    %80 = vector.broadcast %cst_38 : f32 to vector<1x32xf32>
    %81 = arith.maximumf %79, %80 : vector<1x32xf32>
    %c2_39 = arith.constant 2 : index
    %c0_40 = arith.constant 0 : index
    %c0_41 = arith.constant 0 : index
    %82 = vector.load %arg2[%c2_39, %c0_40, %c0_41] : memref<5x1x32xf32, #tpu.memory_space<vmem>>, vector<1x1x32xf32>
    %83 = vector.shape_cast %82 : vector<1x1x32xf32> to vector<1x32xf32>
    %cst_42 = arith.constant 9.99999974E-6 : f32
    %84 = vector.broadcast %cst_42 : f32 to vector<1x32xf32>
    %85 = arith.addf %81, %84 : vector<1x32xf32>
    %86 = math.rsqrt %85 : vector<1x32xf32>
    %87 = arith.mulf %83, %86 : vector<1x32xf32>
    %c2_43 = arith.constant 2 : index
    %c0_44 = arith.constant 0 : index
    %c0_45 = arith.constant 0 : index
    %88 = vector.load %arg3[%c2_43, %c0_44, %c0_45] : memref<5x1x32xf32, #tpu.memory_space<vmem>>, vector<1x1x32xf32>
    %89 = vector.shape_cast %88 : vector<1x1x32xf32> to vector<1x32xf32>
    %90 = arith.mulf %74, %87 : vector<1x32xf32>
    %91 = arith.subf %89, %90 : vector<1x32xf32>
    %92 = vector.broadcast %87 : vector<1x32xf32> to vector<16x32xf32>
    %93 = arith.mulf %68, %92 : vector<16x32xf32>
    %94 = vector.broadcast %91 : vector<1x32xf32> to vector<16x32xf32>
    %95 = arith.addf %93, %94 : vector<16x32xf32>
    %cst_46 = arith.constant 0.000000e+00 : f32
    %96 = vector.broadcast %cst_46 : f32 to vector<16x32xf32>
    %97 = arith.maximumf %95, %96 : vector<16x32xf32>
    %c3 = arith.constant 3 : index
    %c0_47 = arith.constant 0 : index
    %c0_48 = arith.constant 0 : index
    %98 = vector.load %arg1[%c3, %c0_47, %c0_48] : memref<5x32x32xf32, #tpu.memory_space<vmem>>, vector<1x32x32xf32>
    %99 = vector.shape_cast %98 : vector<1x32x32xf32> to vector<32x32xf32>
    %cst_49 = arith.constant dense<0.000000e+00> : vector<16x32xf32>
    %100 = tpu.matmul %97, %99, %cst_49 {dimension_numbers = #tpu.dot_dimension_numbers<[1], [0], [0], [1], [0, 0, 1, 1], [], []>} : vector<16x32xf32>, vector<32x32xf32>, vector<16x32xf32> -> vector<16x32xf32>
    %101 = arith.mulf %100, %100 : vector<16x32xf32>
    %102 = tpu.concatenate %100, %101 in 1 : vector<16x32xf32>, vector<16x32xf32> -> vector<16x64xf32>
    %cst_50 = arith.constant dense<0.000000e+00> : vector<1x64xf32>
    %103 = tpu.matmul %1, %102, %cst_50 {dimension_numbers = #tpu.dot_dimension_numbers<[1], [0], [0], [1], [0, 0, 1, 1], [], []>} : vector<1x16xf32>, vector<16x64xf32>, vector<1x64xf32> -> vector<1x64xf32>
    %104 = vector.extract_strided_slice %103 {offsets = [0, 0], sizes = [1, 32], strides = [1, 1]} : vector<1x64xf32> to vector<1x32xf32>
    %cst_51 = arith.constant 6.250000e-02 : f32
    %105 = vector.broadcast %cst_51 : f32 to vector<1x32xf32>
    %106 = arith.mulf %104, %105 : vector<1x32xf32>
    %107 = vector.extract_strided_slice %103 {offsets = [0, 32], sizes = [1, 32], strides = [1, 1]} : vector<1x64xf32> to vector<1x32xf32>
    %cst_52 = arith.constant 6.250000e-02 : f32
    %108 = vector.broadcast %cst_52 : f32 to vector<1x32xf32>
    %109 = arith.mulf %107, %108 : vector<1x32xf32>
    %110 = arith.mulf %106, %106 : vector<1x32xf32>
    %111 = arith.subf %109, %110 : vector<1x32xf32>
    %cst_53 = arith.constant 0.000000e+00 : f32
    %112 = vector.broadcast %cst_53 : f32 to vector<1x32xf32>
    %113 = arith.maximumf %111, %112 : vector<1x32xf32>
    %c3_54 = arith.constant 3 : index
    %c0_55 = arith.constant 0 : index
    %c0_56 = arith.constant 0 : index
    %114 = vector.load %arg2[%c3_54, %c0_55, %c0_56] : memref<5x1x32xf32, #tpu.memory_space<vmem>>, vector<1x1x32xf32>
    %115 = vector.shape_cast %114 : vector<1x1x32xf32> to vector<1x32xf32>
    %cst_57 = arith.constant 9.99999974E-6 : f32
    %116 = vector.broadcast %cst_57 : f32 to vector<1x32xf32>
    %117 = arith.addf %113, %116 : vector<1x32xf32>
    %118 = math.rsqrt %117 : vector<1x32xf32>
    %119 = arith.mulf %115, %118 : vector<1x32xf32>
    %c3_58 = arith.constant 3 : index
    %c0_59 = arith.constant 0 : index
    %c0_60 = arith.constant 0 : index
    %120 = vector.load %arg3[%c3_58, %c0_59, %c0_60] : memref<5x1x32xf32, #tpu.memory_space<vmem>>, vector<1x1x32xf32>
    %121 = vector.shape_cast %120 : vector<1x1x32xf32> to vector<1x32xf32>
    %122 = arith.mulf %106, %119 : vector<1x32xf32>
    %123 = arith.subf %121, %122 : vector<1x32xf32>
    %124 = vector.broadcast %119 : vector<1x32xf32> to vector<16x32xf32>
    %125 = arith.mulf %100, %124 : vector<16x32xf32>
    %126 = vector.broadcast %123 : vector<1x32xf32> to vector<16x32xf32>
    %127 = arith.addf %125, %126 : vector<16x32xf32>
    %cst_61 = arith.constant 0.000000e+00 : f32
    %128 = vector.broadcast %cst_61 : f32 to vector<16x32xf32>
    %129 = arith.maximumf %127, %128 : vector<16x32xf32>
    %c4 = arith.constant 4 : index
    %c0_62 = arith.constant 0 : index
    %c0_63 = arith.constant 0 : index
    %130 = vector.load %arg1[%c4, %c0_62, %c0_63] : memref<5x32x32xf32, #tpu.memory_space<vmem>>, vector<1x32x32xf32>
    %131 = vector.shape_cast %130 : vector<1x32x32xf32> to vector<32x32xf32>
    %cst_64 = arith.constant dense<0.000000e+00> : vector<16x32xf32>
    %132 = tpu.matmul %129, %131, %cst_64 {dimension_numbers = #tpu.dot_dimension_numbers<[1], [0], [0], [1], [0, 0, 1, 1], [], []>} : vector<16x32xf32>, vector<32x32xf32>, vector<16x32xf32> -> vector<16x32xf32>
    %133 = arith.mulf %132, %132 : vector<16x32xf32>
    %134 = tpu.concatenate %132, %133 in 1 : vector<16x32xf32>, vector<16x32xf32> -> vector<16x64xf32>
    %cst_65 = arith.constant dense<0.000000e+00> : vector<1x64xf32>
    %135 = tpu.matmul %1, %134, %cst_65 {dimension_numbers = #tpu.dot_dimension_numbers<[1], [0], [0], [1], [0, 0, 1, 1], [], []>} : vector<1x16xf32>, vector<16x64xf32>, vector<1x64xf32> -> vector<1x64xf32>
    %136 = vector.extract_strided_slice %135 {offsets = [0, 0], sizes = [1, 32], strides = [1, 1]} : vector<1x64xf32> to vector<1x32xf32>
    %cst_66 = arith.constant 6.250000e-02 : f32
    %137 = vector.broadcast %cst_66 : f32 to vector<1x32xf32>
    %138 = arith.mulf %136, %137 : vector<1x32xf32>
    %139 = vector.extract_strided_slice %135 {offsets = [0, 32], sizes = [1, 32], strides = [1, 1]} : vector<1x64xf32> to vector<1x32xf32>
    %cst_67 = arith.constant 6.250000e-02 : f32
    %140 = vector.broadcast %cst_67 : f32 to vector<1x32xf32>
    %141 = arith.mulf %139, %140 : vector<1x32xf32>
    %142 = arith.mulf %138, %138 : vector<1x32xf32>
    %143 = arith.subf %141, %142 : vector<1x32xf32>
    %cst_68 = arith.constant 0.000000e+00 : f32
    %144 = vector.broadcast %cst_68 : f32 to vector<1x32xf32>
    %145 = arith.maximumf %143, %144 : vector<1x32xf32>
    %c4_69 = arith.constant 4 : index
    %c0_70 = arith.constant 0 : index
    %c0_71 = arith.constant 0 : index
    %146 = vector.load %arg2[%c4_69, %c0_70, %c0_71] : memref<5x1x32xf32, #tpu.memory_space<vmem>>, vector<1x1x32xf32>
    %147 = vector.shape_cast %146 : vector<1x1x32xf32> to vector<1x32xf32>
    %cst_72 = arith.constant 9.99999974E-6 : f32
    %148 = vector.broadcast %cst_72 : f32 to vector<1x32xf32>
    %149 = arith.addf %145, %148 : vector<1x32xf32>
    %150 = math.rsqrt %149 : vector<1x32xf32>
    %151 = arith.mulf %147, %150 : vector<1x32xf32>
    %c4_73 = arith.constant 4 : index
    %c0_74 = arith.constant 0 : index
    %c0_75 = arith.constant 0 : index
    %152 = vector.load %arg3[%c4_73, %c0_74, %c0_75] : memref<5x1x32xf32, #tpu.memory_space<vmem>>, vector<1x1x32xf32>
    %153 = vector.shape_cast %152 : vector<1x1x32xf32> to vector<1x32xf32>
    %154 = arith.mulf %138, %151 : vector<1x32xf32>
    %155 = arith.subf %153, %154 : vector<1x32xf32>
    %156 = vector.broadcast %151 : vector<1x32xf32> to vector<16x32xf32>
    %157 = arith.mulf %132, %156 : vector<16x32xf32>
    %158 = vector.broadcast %155 : vector<1x32xf32> to vector<16x32xf32>
    %159 = arith.addf %157, %158 : vector<16x32xf32>
    %cst_76 = arith.constant 0.000000e+00 : f32
    %160 = vector.broadcast %cst_76 : f32 to vector<16x32xf32>
    %161 = arith.maximumf %159, %160 : vector<16x32xf32>
    %c0_77 = arith.constant 0 : index
    %c0_78 = arith.constant 0 : index
    %162 = vector.load %arg4[%c0_77, %c0_78] : memref<32x128xf32, #tpu.memory_space<vmem>>, vector<32x128xf32>
    %cst_79 = arith.constant dense<0.000000e+00> : vector<16x128xf32>
    %163 = tpu.matmul %161, %162, %cst_79 {dimension_numbers = #tpu.dot_dimension_numbers<[1], [0], [0], [1], [0, 0, 1, 1], [], []>} : vector<16x32xf32>, vector<32x128xf32>, vector<16x128xf32> -> vector<16x128xf32>
    %c0_80 = arith.constant 0 : index
    %c0_81 = arith.constant 0 : index
    %164 = vector.load %arg5[%c0_80, %c0_81] : memref<1x128xf32, #tpu.memory_space<vmem>>, vector<1x128xf32>
    %165 = vector.broadcast %164 : vector<1x128xf32> to vector<16x128xf32>
    %166 = arith.addf %163, %165 : vector<16x128xf32>
    %c0_82 = arith.constant 0 : index
    %c0_83 = arith.constant 0 : index
    %167 = vector.load %arg6[%c0_82, %c0_83] : memref<16x128xf32, #tpu.memory_space<vmem>>, vector<16x128xf32>
    tpu.vector_store %arg6[%c0_82, %c0_83], %166 {strides = array<i32>} : memref<16x128xf32, #tpu.memory_space<vmem>>, vector<16x128xf32>,
    return
  }
}

</mosaic_0001>

<llo_original>
// kernel: graphdnet_forward.1
$region0: #{graphdnet_forward.1}
  #allocation0 [shape = 'u32[]', space=smem, size = 0x4, offset = 0x4, fixed_abs, tag = 'smem constant byte address 0x4 - core index']
  #allocation1 [shape = 'u32[144,128]{1,0:T(1,128)}', space=vmem, size = 0x12000, scoped, tag = 'internal scratch']
  %s0 = inlined_call_operand.hbm [shape: f32[16,32], index: 0, kind: input, shape index: {}]
  %s1 = inlined_call_operand.hbm [shape: f32[5,32,32], index: 1, kind: input, shape index: {}]
  %s2 = inlined_call_operand.vmem [shape: f32[5,1,32], index: 2, kind: input, shape index: {}]
  %s3 = inlined_call_operand.vmem [shape: f32[5,1,32], index: 3, kind: input, shape index: {}]
  %s4 = inlined_call_operand.hbm [shape: f32[32,128], index: 4, kind: input, shape index: {}]
  %s5 = inlined_call_operand.vmem [shape: f32[1,128], index: 5, kind: input, shape index: {}]
  %s6 = inlined_call_operand.hbm [shape: f32[16,128], index: 6, kind: output, shape index: {}]
  %s7 = sld [smem:[#allocation0]]
  $region46: #{graphdnet_forward.1} parent=0
    _
  %s9 = ssub.s32 1, %s7
  %s10 = scalar_select 0, %s9, %s7
  $region1: #{graphdnet_forward.1} parent=0
    #allocation2 [shape = 'u8[8192]{0}', space=vmem, size = 0x2000, scoped, tag = 'input window, operand 0, single buffered']
    #allocation3 [shape = 's32[1]{0}', space=sflag, size = 0x4, scoped, tag = 'scoped memory for graphdnet_forward.1']
    #allocation4 [shape = 's32[1]{0}', space=sflag, size = 0x4, scoped, tag = 'scoped memory for graphdnet_forward.1']
    #allocation5 [shape = 'u8[81920]{0}', space=vmem, size = 0x14000, scoped, tag = 'input window, operand 1, single buffered']
    #allocation6 [shape = 's32[1]{0}', space=sflag, size = 0x4, scoped, tag = 'scoped memory for graphdnet_forward.1']
    #allocation7 [shape = 'u8[16384]{0}', space=vmem, size = 0x4000, scoped, tag = 'input window, operand 4, single buffered']
    #allocation8 [shape = 'u8[8192]{0}', space=vmem, size = 0x2000, scoped, tag = 'output window, operand 0, single buffered']
    %11 = vsyncpa [#allocation3], 0
    %12 = vsyncpa [#allocation6], 0
    %13 = vsyncpa [#allocation4], 0
    // Predicated region
    $region2: #{graphdnet_forward.1} parent=1 // pred_check
      _
    $region3: #{graphdnet_forward.1} parent=1 // pred_check_branch
      %15 = sbr.rel (0) target = $region5
    $region4: #{graphdnet_forward.1} parent=1 // pred_region
      %s17 = ssub.s32 256, 256
      %18 = vsyncadd [#allocation3], %s17
      %s19 = sshll.u32 [#allocation2], 4
      %s20 = int_to_ptr.vmem [resolvable:$true] %s19
      %25 = dma.hbm_to_vmem [thread:$0]  %s0, 256, %s20, [#allocation3], 128, 128, 8
    $region5: #{graphdnet_forward.1} parent=1 // pred_fallthru
      _
    // Predicated region
    $region6: #{graphdnet_forward.1} parent=1 // pred_check
      _
    $region7: #{graphdnet_forward.1} parent=1 // pred_check_branch
      %27 = sbr.rel (0) target = $region9
    $region8: #{graphdnet_forward.1} parent=1 // pred_region
      %s29 = ssub.s32 2560, 2560
      %30 = vsyncadd [#allocation6], %s29
      %s31 = sshll.u32 [#allocation5], 4
      %s32 = int_to_ptr.vmem [resolvable:$true] %s31
      %37 = dma.hbm_to_vmem [thread:$0]  %s1, 2560, %s32, [#allocation6], 128, 128, 8
    $region9: #{graphdnet_forward.1} parent=1 // pred_fallthru
      _
    // Predicated region
    $region10: #{graphdnet_forward.1} parent=1 // pred_check
      _
    $region11: #{graphdnet_forward.1} parent=1 // pred_check_branch
      %39 = sbr.rel (0) target = $region13
    $region12: #{graphdnet_forward.1} parent=1 // pred_region
      _
    $region13: #{graphdnet_forward.1} parent=1 // pred_fallthru
      _
    // Predicated region
    $region14: #{graphdnet_forward.1} parent=1 // pred_check
      _
    $region15: #{graphdnet_forward.1} parent=1 // pred_check_branch
      %41 = sbr.rel (0) target = $region17
    $region16: #{graphdnet_forward.1} parent=1 // pred_region
      _
    $region17: #{graphdnet_forward.1} parent=1 // pred_fallthru
      _
    // Predicated region
    $region18: #{graphdnet_forward.1} parent=1 // pred_check
      _
    $region19: #{graphdnet_forward.1} parent=1 // pred_check_branch
      %43 = sbr.rel (0) target = $region21
    $region20: #{graphdnet_forward.1} parent=1 // pred_region
      %s45 = ssub.s32 512, 512
      %46 = vsyncadd [#allocation6], %s45
      %s47 = sshll.u32 [#allocation7], 4
      %s48 = int_to_ptr.vmem [resolvable:$true] %s47
      %53 = dma.hbm_to_vmem [thread:$0]  %s4, 512, %s48, [#allocation6], 128, 128, 8
    $region21: #{graphdnet_forward.1} parent=1 // pred_fallthru
      _
    // Predicated region
    $region22: #{graphdnet_forward.1} parent=1 // pred_check
      _
    $region23: #{graphdnet_forward.1} parent=1 // pred_check_branch
      %55 = sbr.rel (0) target = $region25
    $region24: #{graphdnet_forward.1} parent=1 // pred_region
      _
    $region25: #{graphdnet_forward.1} parent=1 // pred_fallthru
      _
    // Predicated region
    $region26: #{graphdnet_forward.1} parent=1 // pred_check
      _
    $region27: #{graphdnet_forward.1} parent=1 // pred_check_branch
      %57 = sbr.rel (0) target = $region29
    $region28: #{graphdnet_forward.1} parent=1 // pred_region
      %58 = dma.done [#allocation3], 256
    $region29: #{graphdnet_forward.1} parent=1 // pred_fallthru
      _
    // Predicated region
    $region30: #{graphdnet_forward.1} parent=1 // pred_check
      _
    $region31: #{graphdnet_forward.1} parent=1 // pred_check_branch
      %60 = sbr.rel (0) target = $region33
    $region32: #{graphdnet_forward.1} parent=1 // pred_region
      %61 = dma.done [#allocation6], 2560
    $region33: #{graphdnet_forward.1} parent=1 // pred_fallthru
      _
    // Predicated region
    $region34: #{graphdnet_forward.1} parent=1 // pred_check
      _
    $region35: #{graphdnet_forward.1} parent=1 // pred_check_branch
      %63 = sbr.rel (0) target = $region37
    $region36: #{graphdnet_forward.1} parent=1 // pred_region
      %64 = dma.done [#allocation6], 512
    $region37: #{graphdnet_forward.1} parent=1 // pred_fallthru
      _
    %v65 = vld [vmem:[#allocation2] sm:$0xff]
    %v66 = vld [vmem:[#allocation2 + $0x8] sm:$0xff]
    %v67 = vld [vmem:[#allocation5] sm:$0xff]
    %v68 = vld [vmem:[#allocation5 + $0x8] sm:$0xff]
    %v69 = vld [vmem:[#allocation5 + $0x10] sm:$0xff]
    %v70 = vld [vmem:[#allocation5 + $0x18] sm:$0xff]
    %vm71 = vcmask 261120
    %v73 = vsel %vm71, %v65, 0
    %v76 = vsel %vm71, %v66, 0
    %78 = vmatprep.subr.mxu0 0.0
    %79 = vmatpush1.msra.mxu0 %v67
    %80 = vmatprep.subr.mxu0 0.0
    %81 = vmatpush1.msra.mxu0 %v68
    %82 = vmatprep.subr.mxu0 0.0
    %83 = vmatpush1.msra.mxu0 %v69
    %84 = vmatprep.subr.mxu0 0.0
    %85 = vmatpush1.msra.mxu0 %v70
    %86 = vmatprep.subr.mxu0 0.0
    %87 = vmatpush1.msra.mxu0 0.0
    %88 = vmatprep.subr.mxu0 0.0
    %89 = vmatpush1.msra.mxu0 0.0
    %90 = vmatprep.subr.mxu0 0.0
    %91 = vmatpush1.msra.mxu0 0.0
    %92 = vmatprep.subr.mxu0 0.0
    %93 = vmatpush1.msra.mxu0 0.0
    %94 = vmatprep.subr.mxu0 0.0
    %95 = vmatpush1.msra.mxu0 0.0
    %96 = vmatprep.subr.mxu0 0.0
    %97 = vmatpush1.msra.mxu0 0.0
    %98 = vmatprep.subr.mxu0 0.0
    %99 = vmatpush1.msra.mxu0 0.0
    %100 = vmatprep.subr.mxu0 0.0
    %101 = vmatpush1.msra.mxu0 0.0
    %102 = vmatprep.subr.mxu0 0.0
    %103 = vmatpush1.msra.mxu0 0.0
    %104 = vmatprep.subr.mxu0 0.0
    %105 = vmatpush1.msra.mxu0 0.0
    %106 = vmatprep.subr.mxu0 0.0
    %107 = vmatpush1.msra.mxu0 0.0
    %108 = vmatprep.subr.mxu0 0.0
    %109 = vmatpush1.msra.mxu0 0.0
    %110 = vmatprep.subr.mxu0 0.0
    %111 = vmatpush1.msra.mxu0 0.0
    %112 = vmatprep.subr.mxu0 0.0
    %113 = vmatpush1.msra.mxu0 0.0
    %114 = vmatprep.subr.mxu0 0.0
    %115 = vmatpush1.msra.mxu0 0.0
    %116 = vmatprep.subr.mxu0 0.0
    %117 = vmatpush1.msra.mxu0 0.0
    %118 = vmatprep.subr.mxu0 0.0
    %119 = vmatpush1.msra.mxu0 0.0
    %120 = vmatprep.subr.mxu0 0.0
    %121 = vmatpush1.msra.mxu0 0.0
    %122 = vmatprep.subr.mxu0 0.0
    %123 = vmatpush1.msra.mxu0 0.0
    %124 = vmatprep.subr.mxu0 0.0
    %125 = vmatpush1.msra.mxu0 0.0
    %126 = vmatprep.subr.mxu0 0.0
    %127 = vmatpush1.msra.mxu0 0.0
    %128 = vmatprep.subr.mxu0 0.0
    %129 = vmatpush1.msra.mxu0 0.0
    %130 = vmatprep.subr.mxu0 0.0
    %131 = vmatpush1.msra.mxu0 0.0
    %132 = vmatprep.subr.mxu0 0.0
    %133 = vmatpush1.msra.mxu0 0.0
    %134 = vmatprep.subr.mxu0 0.0
    %135 = vmatpush1.msra.mxu0 0.0
    %136 = vmatprep.subr.mxu0 0.0
    %137 = vmatpush1.msra.mxu0 0.0
    %138 = vmatprep.subr.mxu0 0.0
    %139 = vmatpush1.msra.mxu0 0.0
    %140 = vmatprep.subr.mxu0 0.0
    %141 = vmatpush1.msra.mxu0 0.0
    %142 = vmatprep.mubr.f32.mxu0 0.0
    %143 = vmatmul.mubr.f32.gmra.mrb[0].mxu0 %v73
    %v144 = vpop.f32.mrb[0].mxu0
    %v145 = vadd.f32 0.0, %v144
    %v146 = vpop.f32.mrb[0].mxu0
    %147 = vmatprep.mubr.f32.mxu0 0.0
    %148 = vmatmul.mubr.f32.gmra.mrb[0].mxu0 %v76
    %v149 = vpop.f32.mrb[0].mxu0
    %v150 = vadd.f32 0.0, %v149
    %v151 = vpop.f32.mrb[0].mxu0
    %152 = vdwg.mxu0
    %v153 = vmul.f32 %v145, %v145
    %v154 = vmul.f32 %v150, %v150
    %157 = vrot.lane.b32.xlu0 %v153, 32
    %v158 = vpop.permute.xlu0 %157
    %159 = vrot.lane.b32.xlu0 %v154, 32
    %v160 = vpop.permute.xlu0 %159
    %v163 = vsel %vm71, %v145, %v158
    %v164 = vsel %vm71, %v150, %v160
    %vm165 = vcmask 130048
    %v167 = vsel %vm165, 1.0, 0
    %169 = vmatprep.subr.mxu0 0.0
    %170 = vmatpush1.msra.mxu0 %v163
    %171 = vmatprep.subr.mxu0 0.0
    %172 = vmatpush1.msra.mxu0 %v164
    %173 = vmatprep.subr.mxu0 0.0
    %174 = vmatpush1.msra.mxu0 0.0
    %175 = vmatprep.subr.mxu0 0.0
    %176 = vmatpush1.msra.mxu0 0.0
    %177 = vmatprep.subr.mxu0 0.0
    %178 = vmatpush1.msra.mxu0 0.0
    %179 = vmatprep.subr.mxu0 0.0
    %180 = vmatpush1.msra.mxu0 0.0
    %181 = vmatprep.subr.mxu0 0.0
    %182 = vmatpush1.msra.mxu0 0.0
    %183 = vmatprep.subr.mxu0 0.0
    %184 = vmatpush1.msra.mxu0 0.0
    %185 = vmatprep.subr.mxu0 0.0
    %186 = vmatpush1.msra.mxu0 0.0
    %187 = vmatprep.subr.mxu0 0.0
    %188 = vmatpush1.msra.mxu0 0.0
    %189 = vmatprep.subr.mxu0 0.0
    %190 = vmatpush1.msra.mxu0 0.0
    %191 = vmatprep.subr.mxu0 0.0
    %192 = vmatpush1.msra.mxu0 0.0
    %193 = vmatprep.subr.mxu0 0.0
    %194 = vmatpush1.msra.mxu0 0.0
    %195 = vmatprep.subr.mxu0 0.0
    %196 = vmatpush1.msra.mxu0 0.0
    %197 = vmatprep.subr.mxu0 0.0
    %198 = vmatpush1.msra.mxu0 0.0
    %199 = vmatprep.subr.mxu0 0.0
    %200 = vmatpush1.msra.mxu0 0.0
    %201 = vmatprep.subr.mxu0 0.0
    %202 = vmatpush1.msra.mxu0 0.0
    %203 = vmatprep.subr.mxu0 0.0
    %204 = vmatpush1.msra.mxu0 0.0
    %205 = vmatprep.subr.mxu0 0.0
    %206 = vmatpush1.msra.mxu0 0.0
    %207 = vmatprep.subr.mxu0 0.0
    %208 = vmatpush1.msra.mxu0 0.0
    %209 = vmatprep.subr.mxu0 0.0
    %210 = vmatpush1.msra.mxu0 0.0
    %211 = vmatprep.subr.mxu0 0.0
    %212 = vmatpush1.msra.mxu0 0.0
    %213 = vmatprep.subr.mxu0 0.0
    %214 = vmatpush1.msra.mxu0 0.0
    %215 = vmatprep.subr.mxu0 0.0
    %216 = vmatpush1.msra.mxu0 0.0
    %217 = vmatprep.subr.mxu0 0.0
    %218 = vmatpush1.msra.mxu0 0.0
    %219 = vmatprep.subr.mxu0 0.0
    %220 = vmatpush1.msra.mxu0 0.0
    %221 = vmatprep.subr.mxu0 0.0
    %222 = vmatpush1.msra.mxu0 0.0
    %223 = vmatprep.subr.mxu0 0.0
    %224 = vmatpush1.msra.mxu0 0.0
    %225 = vmatprep.subr.mxu0 0.0
    %226 = vmatpush1.msra.mxu0 0.0
    %227 = vmatprep.subr.mxu0 0.0
    %228 = vmatpush1.msra.mxu0 0.0
    %229 = vmatprep.subr.mxu0 0.0
    %230 = vmatpush1.msra.mxu0 0.0
    %231 = vmatprep.subr.mxu0 0.0
    %232 = vmatpush1.msra.mxu0 0.0
    %233 = vmatprep.mubr.f32.mxu0 0.0
    %234 = vmatmul.mubr.f32.gmra.mrb[0].mxu0 %v167
    %v235 = vpop.f32.mrb[0].mxu0
    %v236 = vadd.f32 0.0, %v235
    %v237 = vpop.f32.mrb[0].mxu0
    %238 = vdwg.mxu0
    %v239 = vmul.f32 %v236, 0.0625
    %v240 = vmul.f32 %v239, %v239
    %242 = vrot.lane.b32.xlu0 %v240, 32
    %v243 = vpop.permute.xlu0 %242
    %v245 = vsub.f32 %v239, %v243
    %v246 = vmax.f32 %v245, 0.0
    %v247 = vld [vmem:[%s2] sm:$0x1]
    %v248 = vadd.f32 %v246, 1e-05
    %v249 = vrsqrt.pop %v248
    %v252 = vunpack.c.l.s4 1966171168
    %v253 = vunpack.c.0.s8 %v252
    %v254 = vlaneseq
    %v255 = vshrl.u32 %v254, 7
    %v256 = vsub.s32 %v253, %v255
    %v257 = vrot.slane %v249, %v256
    %v259 = vunpack.c.l.s4 1966171168
    %v260 = vunpack.c.0.s8 %v259
    %v261 = vlaneseq
    %v262 = vshrl.u32 %v261, 7
    %v263 = vsub.s32 %v260, %v262
    %v264 = vrot.slane %v257, %v263
    %265 = vrot.lane.b32.xlu0 %v264, 96
    %v266 = vpop.permute.xlu0 %265
    %v268 = vmul.f32 %v247, %v266
    %v269 = vld [vmem:[%s3] sm:$0x1]
    %v270 = vmul.f32 %v239, %v268
    %v271 = vsub.f32 %v269, %v270
    %v273 = vlaneseq
    %v274 = vshrl.u32 %v273, 7
    %v275 = vsub.s32 0, %v274
    %v276 = vrot.slane %v268, %v275
    %v278 = vmul.f32 %v145, %v276
    %v279 = vmul.f32 %v150, %v276
    %v281 = vlaneseq
    %v282 = vshrl.u32 %v281, 7
    %v283 = vsub.s32 0, %v282
    %v284 = vrot.slane %v271, %v283
    %v286 = vadd.f32 %v278, %v284
    %v287 = vadd.f32 %v279, %v284
    %v288 = vmax.f32 %v286, 0.0
    %v289 = vmax.f32 %v287, 0.0
    %s290 = scalar_lea.vmem [#allocation5], 32
    %v291 = vld [vmem:[%s290] sm:$0xff]
    %v292 = vld [vmem:[%s290 + $0x8] sm:$0xff]
    %v293 = vld [vmem:[%s290 + $0x10] sm:$0xff]
    %v294 = vld [vmem:[%s290 + $0x18] sm:$0xff]
    %v296 = vsel %vm71, %v288, 0
    %v299 = vsel %vm71, %v289, 0
    %301 = vmatprep.subr.mxu0 0.0
    %302 = vmatpush1.msra.mxu0 %v291
    %303 = vmatprep.subr.mxu0 0.0
    %304 = vmatpush1.msra.mxu0 %v292
    %305 = vmatprep.subr.mxu0 0.0
    %306 = vmatpush1.msra.mxu0 %v293
    %307 = vmatprep.subr.mxu0 0.0
    %308 = vmatpush1.msra.mxu0 %v294
    %309 = vmatprep.subr.mxu0 0.0
    %310 = vmatpush1.msra.mxu0 0.0
    %311 = vmatprep.subr.mxu0 0.0
    %312 = vmatpush1.msra.mxu0 0.0
    %313 = vmatprep.subr.mxu0 0.0
    %314 = vmatpush1.msra.mxu0 0.0
    %315 = vmatprep.subr.mxu0 0.0
    %316 = vmatpush1.msra.mxu0 0.0
    %317 = vmatprep.subr.mxu0 0.0
    %318 = vmatpush1.msra.mxu0 0.0
    %319 = vmatprep.subr.mxu0 0.0
    %320 = vmatpush1.msra.mxu0 0.0
    %321 = vmatprep.subr.mxu0 0.0
    %322 = vmatpush1.msra.mxu0 0.0
    %323 = vmatprep.subr.mxu0 0.0
    %324 = vmatpush1.msra.mxu0 0.0
    %325 = vmatprep.subr.mxu0 0.0
    %326 = vmatpush1.msra.mxu0 0.0
    %327 = vmatprep.subr.mxu0 0.0
    %328 = vmatpush1.msra.mxu0 0.0
    %329 = vmatprep.subr.mxu0 0.0
    %330 = vmatpush1.msra.mxu0 0.0
    %331 = vmatprep.subr.mxu0 0.0
    %332 = vmatpush1.msra.mxu0 0.0
    %333 = vmatprep.subr.mxu0 0.0
    %334 = vmatpush1.msra.mxu0 0.0
    %335 = vmatprep.subr.mxu0 0.0
    %336 = vmatpush1.msra.mxu0 0.0
    %337 = vmatprep.subr.mxu0 0.0
    %338 = vmatpush1.msra.mxu0 0.0
    %339 = vmatprep.subr.mxu0 0.0
    %340 = vmatpush1.msra.mxu0 0.0
    %341 = vmatprep.subr.mxu0 0.0
    %342 = vmatpush1.msra.mxu0 0.0
    %343 = vmatprep.subr.mxu0 0.0
    %344 = vmatpush1.msra.mxu0 0.0
    %345 = vmatprep.subr.mxu0 0.0
    %346 = vmatpush1.msra.mxu0 0.0
    %347 = vmatprep.subr.mxu0 0.0
    %348 = vmatpush1.msra.mxu0 0.0
    %349 = vmatprep.subr.mxu0 0.0
    %350 = vmatpush1.msra.mxu0 0.0
    %351 = vmatprep.subr.mxu0 0.0
    %352 = vmatpush1.msra.mxu0 0.0
    %353 = vmatprep.subr.mxu0 0.0
    %354 = vmatpush1.msra.mxu0 0.0
    %355 = vmatprep.subr.mxu0 0.0
    %356 = vmatpush1.msra.mxu0 0.0
    %357 = vmatprep.subr.mxu0 0.0
    %358 = vmatpush1.msra.mxu0 0.0
    %359 = vmatprep.subr.mxu0 0.0
    %360 = vmatpush1.msra.mxu0 0.0
    %361 = vmatprep.subr.mxu0 0.0
    %362 = vmatpush1.msra.mxu0 0.0
    %363 = vmatprep.subr.mxu0 0.0
    %364 = vmatpush1.msra.mxu0 0.0
    %365 = vmatprep.mubr.f32.mxu0 0.0
    %366 = vmatmul.mubr.f32.gmra.mrb[0].mxu0 %v296
    %v367 = vpop.f32.mrb[0].mxu0
    %v368 = vadd.f32 0.0, %v367
    %v369 = vpop.f32.mrb[0].mxu0
    %370 = vmatprep.mubr.f32.mxu0 0.0
    %371 = vmatmul.mubr.f32.gmra.mrb[0].mxu0 %v299
    %v372 = vpop.f32.mrb[0].mxu0
    %v373 = vadd.f32 0.0, %v372
    %v374 = vpop.f32.mrb[0].mxu0
    %375 = vdwg.mxu0
    %v376 = vmul.f32 %v368, %v368
    %v377 = vmul.f32 %v373, %v373
    %380 = vrot.lane.b32.xlu0 %v376, 32
    %v381 = vpop.permute.xlu0 %380
    %382 = vrot.lane.b32.xlu0 %v377, 32
    %v383 = vpop.permute.xlu0 %382
    %v386 = vsel %vm71, %v368, %v381
    %v387 = vsel %vm71, %v373, %v383
    %388 = vmatprep.subr.mxu0 0.0
    %389 = vmatpush1.msra.mxu0 %v386
    %390 = vmatprep.subr.mxu0 0.0
    %391 = vmatpush1.msra.mxu0 %v387
    %392 = vmatprep.subr.mxu0 0.0
    %393 = vmatpush1.msra.mxu0 0.0
    %394 = vmatprep.subr.mxu0 0.0
    %395 = vmatpush1.msra.mxu0 0.0
    %396 = vmatprep.subr.mxu0 0.0
    %397 = vmatpush1.msra.mxu0 0.0
    %398 = vmatprep.subr.mxu0 0.0
    %399 = vmatpush1.msra.mxu0 0.0
    %400 = vmatprep.subr.mxu0 0.0
    %401 = vmatpush1.msra.mxu0 0.0
    %402 = vmatprep.subr.mxu0 0.0
    %403 = vmatpush1.msra.mxu0 0.0
    %404 = vmatprep.subr.mxu0 0.0
    %405 = vmatpush1.msra.mxu0 0.0
    %406 = vmatprep.subr.mxu0 0.0
    %407 = vmatpush1.msra.mxu0 0.0
    %408 = vmatprep.subr.mxu0 0.0
    %409 = vmatpush1.msra.mxu0 0.0
    %410 = vmatprep.subr.mxu0 0.0
    %411 = vmatpush1.msra.mxu0 0.0
    %412 = vmatprep.subr.mxu0 0.0
    %413 = vmatpush1.msra.mxu0 0.0
    %414 = vmatprep.subr.mxu0 0.0
    %415 = vmatpush1.msra.mxu0 0.0
    %416 = vmatprep.subr.mxu0 0.0
    %417 = vmatpush1.msra.mxu0 0.0
    %418 = vmatprep.subr.mxu0 0.0
    %419 = vmatpush1.msra.mxu0 0.0
    %420 = vmatprep.subr.mxu0 0.0
    %421 = vmatpush1.msra.mxu0 0.0
    %422 = vmatprep.subr.mxu0 0.0
    %423 = vmatpush1.msra.mxu0 0.0
    %424 = vmatprep.subr.mxu0 0.0
    %425 = vmatpush1.msra.mxu0 0.0
    %426 = vmatprep.subr.mxu0 0.0
    %427 = vmatpush1.msra.mxu0 0.0
    %428 = vmatprep.subr.mxu0 0.0
    %429 = vmatpush1.msra.mxu0 0.0
    %430 = vmatprep.subr.mxu0 0.0
    %431 = vmatpush1.msra.mxu0 0.0
    %432 = vmatprep.subr.mxu0 0.0
    %433 = vmatpush1.msra.mxu0 0.0
    %434 = vmatprep.subr.mxu0 0.0
    %435 = vmatpush1.msra.mxu0 0.0
    %436 = vmatprep.subr.mxu0 0.0
    %437 = vmatpush1.msra.mxu0 0.0
    %438 = vmatprep.subr.mxu0 0.0
    %439 = vmatpush1.msra.mxu0 0.0
    %440 = vmatprep.subr.mxu0 0.0
    %441 = vmatpush1.msra.mxu0 0.0
    %442 = vmatprep.subr.mxu0 0.0
    %443 = vmatpush1.msra.mxu0 0.0
    %444 = vmatprep.subr.mxu0 0.0
    %445 = vmatpush1.msra.mxu0 0.0
    %446 = vmatprep.subr.mxu0 0.0
    %447 = vmatpush1.msra.mxu0 0.0
    %448 = vmatprep.subr.mxu0 0.0
    %449 = vmatpush1.msra.mxu0 0.0
    %450 = vmatprep.subr.mxu0 0.0
    %451 = vmatpush1.msra.mxu0 0.0
    %452 = vmatprep.mubr.f32.mxu0 0.0
    %453 = vmatmul.mubr.f32.gmra.mrb[0].mxu0 %v167
    %v454 = vpop.f32.mrb[0].mxu0
    %v455 = vadd.f32 0.0, %v454
    %v456 = vpop.f32.mrb[0].mxu0
    %457 = vdwg.mxu0
    %v458 = vmul.f32 %v455, 0.0625
    %v459 = vmul.f32 %v458, %v458
    %461 = vrot.lane.b32.xlu0 %v459, 32
    %v462 = vpop.permute.xlu0 %461
    %v464 = vsub.f32 %v458, %v462
    %v465 = vmax.f32 %v464, 0.0
    %s466 = scalar_lea.vmem %s2, 1
    %v467 = vld [vmem:[%s466] sm:$0x1]
    %v468 = vadd.f32 %v465, 1e-05
    %v469 = vrsqrt.pop %v468
    %v472 = vunpack.c.l.s4 1966171168
    %v473 = vunpack.c.0.s8 %v472
    %v474 = vlaneseq
    %v475 = vshrl.u32 %v474, 7
    %v476 = vsub.s32 %v473, %v475
    %v477 = vrot.slane %v469, %v476
    %v479 = vunpack.c.l.s4 1966171168
    %v480 = vunpack.c.0.s8 %v479
    %v481 = vlaneseq
    %v482 = vshrl.u32 %v481, 7
    %v483 = vsub.s32 %v480, %v482
    %v484 = vrot.slane %v477, %v483
    %485 = vrot.lane.b32.xlu0 %v484, 96
    %v486 = vpop.permute.xlu0 %485
    %v488 = vmul.f32 %v467, %v486
    %s489 = scalar_lea.vmem %s3, 1
    %v490 = vld [vmem:[%s489] sm:$0x1]
    %v491 = vmul.f32 %v458, %v488
    %v492 = vsub.f32 %v490, %v491
    %v494 = vlaneseq
    %v495 = vshrl.u32 %v494, 7
    %v496 = vsub.s32 0, %v495
    %v497 = vrot.slane %v488, %v496
    %v499 = vmul.f32 %v368, %v497
    %v500 = vmul.f32 %v373, %v497
    %v502 = vlaneseq
    %v503 = vshrl.u32 %v502, 7
    %v504 = vsub.s32 0, %v503
    %v505 = vrot.slane %v492, %v504
    %v507 = vadd.f32 %v499, %v505
    %v508 = vadd.f32 %v500, %v505
    %v509 = vmax.f32 %v507, 0.0
    %v510 = vmax.f32 %v508, 0.0
    %s511 = scalar_lea.vmem [#allocation5], 64
    %v512 = vld [vmem:[%s511] sm:$0xff]
    %v513 = vld [vmem:[%s511 + $0x8] sm:$0xff]
    %v514 = vld [vmem:[%s511 + $0x10] sm:$0xff]
    %v515 = vld [vmem:[%s511 + $0x18] sm:$0xff]
    %v517 = vsel %vm71, %v509, 0
    %v520 = vsel %vm71, %v510, 0
    %522 = vmatprep.subr.mxu0 0.0
    %523 = vmatpush1.msra.mxu0 %v512
    %524 = vmatprep.subr.mxu0 0.0
    %525 = vmatpush1.msra.mxu0 %v513
    %526 = vmatprep.subr.mxu0 0.0
    %527 = vmatpush1.msra.mxu0 %v514
    %528 = vmatprep.subr.mxu0 0.0
    %529 = vmatpush1.msra.mxu0 %v515
    %530 = vmatprep.subr.mxu0 0.0
    %531 = vmatpush1.msra.mxu0 0.0
    %532 = vmatprep.subr.mxu0 0.0
    %533 = vmatpush1.msra.mxu0 0.0
    %534 = vmatprep.subr.mxu0 0.0
    %535 = vmatpush1.msra.mxu0 0.0
    %536 = vmatprep.subr.mxu0 0.0
    %537 = vmatpush1.msra.mxu0 0.0
    %538 = vmatprep.subr.mxu0 0.0
    %539 = vmatpush1.msra.mxu0 0.0
    %540 = vmatprep.subr.mxu0 0.0
    %541 = vmatpush1.msra.mxu0 0.0
    %542 = vmatprep.subr.mxu0 0.0
    %543 = vmatpush1.msra.mxu0 0.0
    %544 = vmatprep.subr.mxu0 0.0
    %545 = vmatpush1.msra.mxu0 0.0
    %546 = vmatprep.subr.mxu0 0.0
    %547 = vmatpush1.msra.mxu0 0.0
    %548 = vmatprep.subr.mxu0 0.0
    %549 = vmatpush1.msra.mxu0 0.0
    %550 = vmatprep.subr.mxu0 0.0
    %551 = vmatpush1.msra.mxu0 0.0
    %552 = vmatprep.subr.mxu0 0.0
    %553 = vmatpush1.msra.mxu0 0.0
    %554 = vmatprep.subr.mxu0 0.0
    %555 = vmatpush1.msra.mxu0 0.0
    %556 = vmatprep.subr.mxu0 0.0
    %557 = vmatpush1.msra.mxu0 0.0
    %558 = vmatprep.subr.mxu0 0.0
    %559 = vmatpush1.msra.mxu0 0.0
    %560 = vmatprep.subr.mxu0 0.0
    %561 = vmatpush1.msra.mxu0 0.0
    %562 = vmatprep.subr.mxu0 0.0
    %563 = vmatpush1.msra.mxu0 0.0
    %564 = vmatprep.subr.mxu0 0.0
    %565 = vmatpush1.msra.mxu0 0.0
    %566 = vmatprep.subr.mxu0 0.0
    %567 = vmatpush1.msra.mxu0 0.0
    %568 = vmatprep.subr.mxu0 0.0
    %569 = vmatpush1.msra.mxu0 0.0
    %570 = vmatprep.subr.mxu0 0.0
    %571 = vmatpush1.msra.mxu0 0.0
    %572 = vmatprep.subr.mxu0 0.0
    %573 = vmatpush1.msra.mxu0 0.0
    %574 = vmatprep.subr.mxu0 0.0
    %575 = vmatpush1.msra.mxu0 0.0
    %576 = vmatprep.subr.mxu0 0.0
    %577 = vmatpush1.msra.mxu0 0.0
    %578 = vmatprep.subr.mxu0 0.0
    %579 = vmatpush1.msra.mxu0 0.0
    %580 = vmatprep.subr.mxu0 0.0
    %581 = vmatpush1.msra.mxu0 0.0
    %582 = vmatprep.subr.mxu0 0.0
    %583 = vmatpush1.msra.mxu0 0.0
    %584 = vmatprep.subr.mxu0 0.0
    %585 = vmatpush1.msra.mxu0 0.0
    %586 = vmatprep.mubr.f32.mxu0 0.0
    %587 = vmatmul.mubr.f32.gmra.mrb[0].mxu0 %v517
    %v588 = vpop.f32.mrb[0].mxu0
    %v589 = vadd.f32 0.0, %v588
    %v590 = vpop.f32.mrb[0].mxu0
    %591 = vmatprep.mubr.f32.mxu0 0.0
    %592 = vmatmul.mubr.f32.gmra.mrb[0].mxu0 %v520
    %v593 = vpop.f32.mrb[0].mxu0
    %v594 = vadd.f32 0.0, %v593
    %v595 = vpop.f32.mrb[0].mxu0
    %596 = vdwg.mxu0
    %v597 = vmul.f32 %v589, %v589
    %v598 = vmul.f32 %v594, %v594
    %601 = vrot.lane.b32.xlu0 %v597, 32
    %v602 = vpop.permute.xlu0 %601
    %603 = vrot.lane.b32.xlu0 %v598, 32
    %v604 = vpop.permute.xlu0 %603
    %v607 = vsel %vm71, %v589, %v602
    %v608 = vsel %vm71, %v594, %v604
    %609 = vmatprep.subr.mxu0 0.0
    %610 = vmatpush1.msra.mxu0 %v607
    %611 = vmatprep.subr.mxu0 0.0
    %612 = vmatpush1.msra.mxu0 %v608
    %613 = vmatprep.subr.mxu0 0.0
    %614 = vmatpush1.msra.mxu0 0.0
    %615 = vmatprep.subr.mxu0 0.0
    %616 = vmatpush1.msra.mxu0 0.0
    %617 = vmatprep.subr.mxu0 0.0
    %618 = vmatpush1.msra.mxu0 0.0
    %619 = vmatprep.subr.mxu0 0.0
    %620 = vmatpush1.msra.mxu0 0.0
    %621 = vmatprep.subr.mxu0 0.0
    %622 = vmatpush1.msra.mxu0 0.0
    %623 = vmatprep.subr.mxu0 0.0
    %624 = vmatpush1.msra.mxu0 0.0
    %625 = vmatprep.subr.mxu0 0.0
    %626 = vmatpush1.msra.mxu0 0.0
    %627 = vmatprep.subr.mxu0 0.0
    %628 = vmatpush1.msra.mxu0 0.0
    %629 = vmatprep.subr.mxu0 0.0
    %630 = vmatpush1.msra.mxu0 0.0
    %631 = vmatprep.subr.mxu0 0.0
    %632 = vmatpush1.msra.mxu0 0.0
    %633 = vmatprep.subr.mxu0 0.0
    %634 = vmatpush1.msra.mxu0 0.0
    %635 = vmatprep.subr.mxu0 0.0
    %636 = vmatpush1.msra.mxu0 0.0
    %637 = vmatprep.subr.mxu0 0.0
    %638 = vmatpush1.msra.mxu0 0.0
    %639 = vmatprep.subr.mxu0 0.0
    %640 = vmatpush1.msra.mxu0 0.0
    %641 = vmatprep.subr.mxu0 0.0
    %642 = vmatpush1.msra.mxu0 0.0
    %643 = vmatprep.subr.mxu0 0.0
    %644 = vmatpush1.msra.mxu0 0.0
    %645 = vmatprep.subr.mxu0 0.0
    %646 = vmatpush1.msra.mxu0 0.0
    %647 = vmatprep.subr.mxu0 0.0
    %648 = vmatpush1.msra.mxu0 0.0
    %649 = vmatprep.subr.mxu0 0.0
    %650 = vmatpush1.msra.mxu0 0.0
    %651 = vmatprep.subr.mxu0 0.0
    %652 = vmatpush1.msra.mxu0 0.0
    %653 = vmatprep.subr.mxu0 0.0
    %654 = vmatpush1.msra.mxu0 0.0
    %655 = vmatprep.subr.mxu0 0.0
    %656 = vmatpush1.msra.mxu0 0.0
    %657 = vmatprep.subr.mxu0 0.0
    %658 = vmatpush1.msra.mxu0 0.0
    %659 = vmatprep.subr.mxu0 0.0
    %660 = vmatpush1.msra.mxu0 0.0
    %661 = vmatprep.subr.mxu0 0.0
    %662 = vmatpush1.msra.mxu0 0.0
    %663 = vmatprep.subr.mxu0 0.0
    %664 = vmatpush1.msra.mxu0 0.0
    %665 = vmatprep.subr.mxu0 0.0
    %666 = vmatpush1.msra.mxu0 0.0
    %667 = vmatprep.subr.mxu0 0.0
    %668 = vmatpush1.msra.mxu0 0.0
    %669 = vmatprep.subr.mxu0 0.0
    %670 = vmatpush1.msra.mxu0 0.0
    %671 = vmatprep.subr.mxu0 0.0
    %672 = vmatpush1.msra.mxu0 0.0
    %673 = vmatprep.mubr.f32.mxu0 0.0
    %674 = vmatmul.mubr.f32.gmra.mrb[0].mxu0 %v167
    %v675 = vpop.f32.mrb[0].mxu0
    %v676 = vadd.f32 0.0, %v675
    %v677 = vpop.f32.mrb[0].mxu0
    %678 = vdwg.mxu0
    %v679 = vmul.f32 %v676, 0.0625
    %v680 = vmul.f32 %v679, %v679
    %682 = vrot.lane.b32.xlu0 %v680, 32
    %v683 = vpop.permute.xlu0 %682
    %v685 = vsub.f32 %v679, %v683
    %v686 = vmax.f32 %v685, 0.0
    %s687 = scalar_lea.vmem %s2, 2
    %v688 = vld [vmem:[%s687] sm:$0x1]
    %v689 = vadd.f32 %v686, 1e-05
    %v690 = vrsqrt.pop %v689
    %v693 = vunpack.c.l.s4 1966171168
    %v694 = vunpack.c.0.s8 %v693
    %v695 = vlaneseq
    %v696 = vshrl.u32 %v695, 7
    %v697 = vsub.s32 %v694, %v696
    %v698 = vrot.slane %v690, %v697
    %v700 = vunpack.c.l.s4 1966171168
    %v701 = vunpack.c.0.s8 %v700
    %v702 = vlaneseq
    %v703 = vshrl.u32 %v702, 7
    %v704 = vsub.s32 %v701, %v703
    %v705 = vrot.slane %v698, %v704
    %706 = vrot.lane.b32.xlu0 %v705, 96
    %v707 = vpop.permute.xlu0 %706
    %v709 = vmul.f32 %v688, %v707
    %s710 = scalar_lea.vmem %s3, 2
    %v711 = vld [vmem:[%s710] sm:$0x1]
    %v712 = vmul.f32 %v679, %v709
    %v713 = vsub.f32 %v711, %v712
    %v715 = vlaneseq
    %v716 = vshrl.u32 %v715, 7
    %v717 = vsub.s32 0, %v716
    %v718 = vrot.slane %v709, %v717
    %v720 = vmul.f32 %v589, %v718
    %v721 = vmul.f32 %v594, %v718
    %v723 = vlaneseq
    %v724 = vshrl.u32 %v723, 7
    %v725 = vsub.s32 0, %v724
    %v726 = vrot.slane %v713, %v725
    %v728 = vadd.f32 %v720, %v726
    %v729 = vadd.f32 %v721, %v726
    %v730 = vmax.f32 %v728, 0.0
    %v731 = vmax.f32 %v729, 0.0
    %s732 = scalar_lea.vmem [#allocation5], 96
    %v733 = vld [vmem:[%s732] sm:$0xff]
    %v734 = vld [vmem:[%s732 + $0x8] sm:$0xff]
    %v735 = vld [vmem:[%s732 + $0x10] sm:$0xff]
    %v736 = vld [vmem:[%s732 + $0x18] sm:$0xff]
    %v738 = vsel %vm71, %v730, 0
    %v741 = vsel %vm71, %v731, 0
    %743 = vmatprep.subr.mxu0 0.0
    %744 = vmatpush1.msra.mxu0 %v733
    %745 = vmatprep.subr.mxu0 0.0
    %746 = vmatpush1.msra.mxu0 %v734
    %747 = vmatprep.subr.mxu0 0.0
    %748 = vmatpush1.msra.mxu0 %v735
    %749 = vmatprep.subr.mxu0 0.0
    %750 = vmatpush1.msra.mxu0 %v736
    %751 = vmatprep.subr.mxu0 0.0
    %752 = vmatpush1.msra.mxu0 0.0
    %753 = vmatprep.subr.mxu0 0.0
    %754 = vmatpush1.msra.mxu0 0.0
    %755 = vmatprep.subr.mxu0 0.0
    %756 = vmatpush1.msra.mxu0 0.0
    %757 = vmatprep.subr.mxu0 0.0
    %758 = vmatpush1.msra.mxu0 0.0
    %759 = vmatprep.subr.mxu0 0.0
    %760 = vmatpush1.msra.mxu0 0.0
    %761 = vmatprep.subr.mxu0 0.0
    %762 = vmatpush1.msra.mxu0 0.0
    %763 = vmatprep.subr.mxu0 0.0
    %764 = vmatpush1.msra.mxu0 0.0
    %765 = vmatprep.subr.mxu0 0.0
    %766 = vmatpush1.msra.mxu0 0.0
    %767 = vmatprep.subr.mxu0 0.0
    %768 = vmatpush1.msra.mxu0 0.0
    %769 = vmatprep.subr.mxu0 0.0
    %770 = vmatpush1.msra.mxu0 0.0
    %771 = vmatprep.subr.mxu0 0.0
    %772 = vmatpush1.msra.mxu0 0.0
    %773 = vmatprep.subr.mxu0 0.0
    %774 = vmatpush1.msra.mxu0 0.0
    %775 = vmatprep.subr.mxu0 0.0
    %776 = vmatpush1.msra.mxu0 0.0
    %777 = vmatprep.subr.mxu0 0.0
    %778 = vmatpush1.msra.mxu0 0.0
    %779 = vmatprep.subr.mxu0 0.0
    %780 = vmatpush1.msra.mxu0 0.0
    %781 = vmatprep.subr.mxu0 0.0
    %782 = vmatpush1.msra.mxu0 0.0
    %783 = vmatprep.subr.mxu0 0.0
    %784 = vmatpush1.msra.mxu0 0.0
    %785 = vmatprep.subr.mxu0 0.0
    %786 = vmatpush1.msra.mxu0 0.0
    %787 = vmatprep.subr.mxu0 0.0
    %788 = vmatpush1.msra.mxu0 0.0
    %789 = vmatprep.subr.mxu0 0.0
    %790 = vmatpush1.msra.mxu0 0.0
    %791 = vmatprep.subr.mxu0 0.0
    %792 = vmatpush1.msra.mxu0 0.0
    %793 = vmatprep.subr.mxu0 0.0
    %794 = vmatpush1.msra.mxu0 0.0
    %795 = vmatprep.subr.mxu0 0.0
    %796 = vmatpush1.msra.mxu0 0.0
    %797 = vmatprep.subr.mxu0 0.0
    %798 = vmatpush1.msra.mxu0 0.0
    %799 = vmatprep.subr.mxu0 0.0
    %800 = vmatpush1.msra.mxu0 0.0
    %801 = vmatprep.subr.mxu0 0.0
    %802 = vmatpush1.msra.mxu0 0.0
    %803 = vmatprep.subr.mxu0 0.0
    %804 = vmatpush1.msra.mxu0 0.0
    %805 = vmatprep.subr.mxu0 0.0
    %806 = vmatpush1.msra.mxu0 0.0
    %807 = vmatprep.mubr.f32.mxu0 0.0
    %808 = vmatmul.mubr.f32.gmra.mrb[0].mxu0 %v738
    %v809 = vpop.f32.mrb[0].mxu0
    %v810 = vadd.f32 0.0, %v809
    %v811 = vpop.f32.mrb[0].mxu0
    %812 = vmatprep.mubr.f32.mxu0 0.0
    %813 = vmatmul.mubr.f32.gmra.mrb[0].mxu0 %v741
    %v814 = vpop.f32.mrb[0].mxu0
    %v815 = vadd.f32 0.0, %v814
    %v816 = vpop.f32.mrb[0].mxu0
    %817 = vdwg.mxu0
    %v818 = vmul.f32 %v810, %v810
    %v819 = vmul.f32 %v815, %v815
    %822 = vrot.lane.b32.xlu0 %v818, 32
    %v823 = vpop.permute.xlu0 %822
    %824 = vrot.lane.b32.xlu0 %v819, 32
    %v825 = vpop.permute.xlu0 %824
    %v828 = vsel %vm71, %v810, %v823
    %v829 = vsel %vm71, %v815, %v825
    %830 = vmatprep.subr.mxu0 0.0
    %831 = vmatpush1.msra.mxu0 %v828
    %832 = vmatprep.subr.mxu0 0.0
    %833 = vmatpush1.msra.mxu0 %v829
    %834 = vmatprep.subr.mxu0 0.0
    %835 = vmatpush1.msra.mxu0 0.0
    %836 = vmatprep.subr.mxu0 0.0
    %837 = vmatpush1.msra.mxu0 0.0
    %838 = vmatprep.subr.mxu0 0.0
    %839 = vmatpush1.msra.mxu0 0.0
    %840 = vmatprep.subr.mxu0 0.0
    %841 = vmatpush1.msra.mxu0 0.0
    %842 = vmatprep.subr.mxu0 0.0
    %843 = vmatpush1.msra.mxu0 0.0
    %844 = vmatprep.subr.mxu0 0.0
    %845 = vmatpush1.msra.mxu0 0.0
    %846 = vmatprep.subr.mxu0 0.0
    %847 = vmatpush1.msra.mxu0 0.0
    %848 = vmatprep.subr.mxu0 0.0
    %849 = vmatpush1.msra.mxu0 0.0
    %850 = vmatprep.subr.mxu0 0.0
    %851 = vmatpush1.msra.mxu0 0.0
    %852 = vmatprep.subr.mxu0 0.0
    %853 = vmatpush1.msra.mxu0 0.0
    %854 = vmatprep.subr.mxu0 0.0
    %855 = vmatpush1.msra.mxu0 0.0
    %856 = vmatprep.subr.mxu0 0.0
    %857 = vmatpush1.msra.mxu0 0.0
    %858 = vmatprep.subr.mxu0 0.0
    %859 = vmatpush1.msra.mxu0 0.0
    %860 = vmatprep.subr.mxu0 0.0
    %861 = vmatpush1.msra.mxu0 0.0
    %862 = vmatprep.subr.mxu0 0.0
    %863 = vmatpush1.msra.mxu0 0.0
    %864 = vmatprep.subr.mxu0 0.0
    %865 = vmatpush1.msra.mxu0 0.0
    %866 = vmatprep.subr.mxu0 0.0
    %867 = vmatpush1.msra.mxu0 0.0
    %868 = vmatprep.subr.mxu0 0.0
    %869 = vmatpush1.msra.mxu0 0.0
    %870 = vmatprep.subr.mxu0 0.0
    %871 = vmatpush1.msra.mxu0 0.0
    %872 = vmatprep.subr.mxu0 0.0
    %873 = vmatpush1.msra.mxu0 0.0
    %874 = vmatprep.subr.mxu0 0.0
    %875 = vmatpush1.msra.mxu0 0.0
    %876 = vmatprep.subr.mxu0 0.0
    %877 = vmatpush1.msra.mxu0 0.0
    %878 = vmatprep.subr.mxu0 0.0
    %879 = vmatpush1.msra.mxu0 0.0
    %880 = vmatprep.subr.mxu0 0.0
    %881 = vmatpush1.msra.mxu0 0.0
    %882 = vmatprep.subr.mxu0 0.0
    %883 = vmatpush1.msra.mxu0 0.0
    %884 = vmatprep.subr.mxu0 0.0
    %885 = vmatpush1.msra.mxu0 0.0
    %886 = vmatprep.subr.mxu0 0.0
    %887 = vmatpush1.msra.mxu0 0.0
    %888 = vmatprep.subr.mxu0 0.0
    %889 = vmatpush1.msra.mxu0 0.0
    %890 = vmatprep.subr.mxu0 0.0
    %891 = vmatpush1.msra.mxu0 0.0
    %892 = vmatprep.subr.mxu0 0.0
    %893 = vmatpush1.msra.mxu0 0.0
    %894 = vmatprep.mubr.f32.mxu0 0.0
    %895 = vmatmul.mubr.f32.gmra.mrb[0].mxu0 %v167
    %v896 = vpop.f32.mrb[0].mxu0
    %v897 = vadd.f32 0.0, %v896
    %v898 = vpop.f32.mrb[0].mxu0
    %899 = vdwg.mxu0
    %v900 = vmul.f32 %v897, 0.0625
    %v901 = vmul.f32 %v900, %v900
    %903 = vrot.lane.b32.xlu0 %v901, 32
    %v904 = vpop.permute.xlu0 %903
    %v906 = vsub.f32 %v900, %v904
    %v907 = vmax.f32 %v906, 0.0
    %s908 = scalar_lea.vmem %s2, 3
    %v909 = vld [vmem:[%s908] sm:$0x1]
    %v910 = vadd.f32 %v907, 1e-05
    %v911 = vrsqrt.pop %v910
    %v914 = vunpack.c.l.s4 1966171168
    %v915 = vunpack.c.0.s8 %v914
    %v916 = vlaneseq
    %v917 = vshrl.u32 %v916, 7
    %v918 = vsub.s32 %v915, %v917
    %v919 = vrot.slane %v911, %v918
    %v921 = vunpack.c.l.s4 1966171168
    %v922 = vunpack.c.0.s8 %v921
    %v923 = vlaneseq
    %v924 = vshrl.u32 %v923, 7
    %v925 = vsub.s32 %v922, %v924
    %v926 = vrot.slane %v919, %v925
    %927 = vrot.lane.b32.xlu0 %v926, 96
    %v928 = vpop.permute.xlu0 %927
    %v930 = vmul.f32 %v909, %v928
    %s931 = scalar_lea.vmem %s3, 3
    %v932 = vld [vmem:[%s931] sm:$0x1]
    %v933 = vmul.f32 %v900, %v930
    %v934 = vsub.f32 %v932, %v933
    %v936 = vlaneseq
    %v937 = vshrl.u32 %v936, 7
    %v938 = vsub.s32 0, %v937
    %v939 = vrot.slane %v930, %v938
    %v941 = vmul.f32 %v810, %v939
    %v942 = vmul.f32 %v815, %v939
    %v944 = vlaneseq
    %v945 = vshrl.u32 %v944, 7
    %v946 = vsub.s32 0, %v945
    %v947 = vrot.slane %v934, %v946
    %v949 = vadd.f32 %v941, %v947
    %v950 = vadd.f32 %v942, %v947
    %v951 = vmax.f32 %v949, 0.0
    %v952 = vmax.f32 %v950, 0.0
    %s953 = scalar_lea.vmem [#allocation5], 128
    %v954 = vld [vmem:[%s953] sm:$0xff]
    %v955 = vld [vmem:[%s953 + $0x8] sm:$0xff]
    %v956 = vld [vmem:[%s953 + $0x10] sm:$0xff]
    %v957 = vld [vmem:[%s953 + $0x18] sm:$0xff]
    %v959 = vsel %vm71, %v951, 0
    %v962 = vsel %vm71, %v952, 0
    %964 = vmatprep.subr.mxu0 0.0
    %965 = vmatpush1.msra.mxu0 %v954
    %966 = vmatprep.subr.mxu0 0.0
    %967 = vmatpush1.msra.mxu0 %v955
    %968 = vmatprep.subr.mxu0 0.0
    %969 = vmatpush1.msra.mxu0 %v956
    %970 = vmatprep.subr.mxu0 0.0
    %971 = vmatpush1.msra.mxu0 %v957
    %972 = vmatprep.subr.mxu0 0.0
    %973 = vmatpush1.msra.mxu0 0.0
    %974 = vmatprep.subr.mxu0 0.0
    %975 = vmatpush1.msra.mxu0 0.0
    %976 = vmatprep.subr.mxu0 0.0
    %977 = vmatpush1.msra.mxu0 0.0
    %978 = vmatprep.subr.mxu0 0.0
    %979 = vmatpush1.msra.mxu0 0.0
    %980 = vmatprep.subr.mxu0 0.0
    %981 = vmatpush1.msra.mxu0 0.0
    %982 = vmatprep.subr.mxu0 0.0
    %983 = vmatpush1.msra.mxu0 0.0
    %984 = vmatprep.subr.mxu0 0.0
    %985 = vmatpush1.msra.mxu0 0.0
    %986 = vmatprep.subr.mxu0 0.0
    %987 = vmatpush1.msra.mxu0 0.0
    %988 = vmatprep.subr.mxu0 0.0
    %989 = vmatpush1.msra.mxu0 0.0
    %990 = vmatprep.subr.mxu0 0.0
    %991 = vmatpush1.msra.mxu0 0.0
    %992 = vmatprep.subr.mxu0 0.0
    %993 = vmatpush1.msra.mxu0 0.0
    %994 = vmatprep.subr.mxu0 0.0
    %995 = vmatpush1.msra.mxu0 0.0
    %996 = vmatprep.subr.mxu0 0.0
    %997 = vmatpush1.msra.mxu0 0.0
    %998 = vmatprep.subr.mxu0 0.0
    %999 = vmatpush1.msra.mxu0 0.0
    %1000 = vmatprep.subr.mxu0 0.0
    %1001 = vmatpush1.msra.mxu0 0.0
    %1002 = vmatprep.subr.mxu0 0.0
    %1003 = vmatpush1.msra.mxu0 0.0
    %1004 = vmatprep.subr.mxu0 0.0
    %1005 = vmatpush1.msra.mxu0 0.0
    %1006 = vmatprep.subr.mxu0 0.0
    %1007 = vmatpush1.msra.mxu0 0.0
    %1008 = vmatprep.subr.mxu0 0.0
    %1009 = vmatpush1.msra.mxu0 0.0
    %1010 = vmatprep.subr.mxu0 0.0
    %1011 = vmatpush1.msra.mxu0 0.0
    %1012 = vmatprep.subr.mxu0 0.0
    %1013 = vmatpush1.msra.mxu0 0.0
    %1014 = vmatprep.subr.mxu0 0.0
    %1015 = vmatpush1.msra.mxu0 0.0
    %1016 = vmatprep.subr.mxu0 0.0
    %1017 = vmatpush1.msra.mxu0 0.0
    %1018 = vmatprep.subr.mxu0 0.0
    %1019 = vmatpush1.msra.mxu0 0.0
    %1020 = vmatprep.subr.mxu0 0.0
    %1021 = vmatpush1.msra.mxu0 0.0
    %1022 = vmatprep.subr.mxu0 0.0
    %1023 = vmatpush1.msra.mxu0 0.0
    %1024 = vmatprep.subr.mxu0 0.0
    %1025 = vmatpush1.msra.mxu0 0.0
    %1026 = vmatprep.subr.mxu0 0.0
    %1027 = vmatpush1.msra.mxu0 0.0
    %1028 = vmatprep.mubr.f32.mxu0 0.0
    %1029 = vmatmul.mubr.f32.gmra.mrb[0].mxu0 %v959
    %v1030 = vpop.f32.mrb[0].mxu0
    %v1031 = vadd.f32 0.0, %v1030
    %v1032 = vpop.f32.mrb[0].mxu0
    %1033 = vmatprep.mubr.f32.mxu0 0.0
    %1034 = vmatmul.mubr.f32.gmra.mrb[0].mxu0 %v962
    %v1035 = vpop.f32.mrb[0].mxu0
    %v1036 = vadd.f32 0.0, %v1035
    %v1037 = vpop.f32.mrb[0].mxu0
    %1038 = vdwg.mxu0
    %v1039 = vmul.f32 %v1031, %v1031
    %v1040 = vmul.f32 %v1036, %v1036
    %1043 = vrot.lane.b32.xlu0 %v1039, 32
    %v1044 = vpop.permute.xlu0 %1043
    %1045 = vrot.lane.b32.xlu0 %v1040, 32
    %v1046 = vpop.permute.xlu0 %1045
    %v1049 = vsel %vm71, %v1031, %v1044
    %v1050 = vsel %vm71, %v1036, %v1046
    %1051 = vmatprep.subr.mxu0 0.0
    %1052 = vmatpush1.msra.mxu0 %v1049
    %1053 = vmatprep.subr.mxu0 0.0
    %1054 = vmatpush1.msra.mxu0 %v1050
    %1055 = vmatprep.subr.mxu0 0.0
    %1056 = vmatpush1.msra.mxu0 0.0
    %1057 = vmatprep.subr.mxu0 0.0
    %1058 = vmatpush1.msra.mxu0 0.0
    %1059 = vmatprep.subr.mxu0 0.0
    %1060 = vmatpush1.msra.mxu0 0.0
    %1061 = vmatprep.subr.mxu0 0.0
    %1062 = vmatpush1.msra.mxu0 0.0
    %1063 = vmatprep.subr.mxu0 0.0
    %1064 = vmatpush1.msra.mxu0 0.0
    %1065 = vmatprep.subr.mxu0 0.0
    %1066 = vmatpush1.msra.mxu0 0.0
    %1067 = vmatprep.subr.mxu0 0.0
    %1068 = vmatpush1.msra.mxu0 0.0
    %1069 = vmatprep.subr.mxu0 0.0
    %1070 = vmatpush1.msra.mxu0 0.0
    %1071 = vmatprep.subr.mxu0 0.0
    %1072 = vmatpush1.msra.mxu0 0.0
    %1073 = vmatprep.subr.mxu0 0.0
    %1074 = vmatpush1.msra.mxu0 0.0
    %1075 = vmatprep.subr.mxu0 0.0
    %1076 = vmatpush1.msra.mxu0 0.0
    %1077 = vmatprep.subr.mxu0 0.0
    %1078 = vmatpush1.msra.mxu0 0.0
    %1079 = vmatprep.subr.mxu0 0.0
    %1080 = vmatpush1.msra.mxu0 0.0
    %1081 = vmatprep.subr.mxu0 0.0
    %1082 = vmatpush1.msra.mxu0 0.0
    %1083 = vmatprep.subr.mxu0 0.0
    %1084 = vmatpush1.msra.mxu0 0.0
    %1085 = vmatprep.subr.mxu0 0.0
    %1086 = vmatpush1.msra.mxu0 0.0
    %1087 = vmatprep.subr.mxu0 0.0
    %1088 = vmatpush1.msra.mxu0 0.0
    %1089 = vmatprep.subr.mxu0 0.0
    %1090 = vmatpush1.msra.mxu0 0.0
    %1091 = vmatprep.subr.mxu0 0.0
    %1092 = vmatpush1.msra.mxu0 0.0
    %1093 = vmatprep.subr.mxu0 0.0
    %1094 = vmatpush1.msra.mxu0 0.0
    %1095 = vmatprep.subr.mxu0 0.0
    %1096 = vmatpush1.msra.mxu0 0.0
    %1097 = vmatprep.subr.mxu0 0.0
    %1098 = vmatpush1.msra.mxu0 0.0
    %1099 = vmatprep.subr.mxu0 0.0
    %1100 = vmatpush1.msra.mxu0 0.0
    %1101 = vmatprep.subr.mxu0 0.0
    %1102 = vmatpush1.msra.mxu0 0.0
    %1103 = vmatprep.subr.mxu0 0.0
    %1104 = vmatpush1.msra.mxu0 0.0
    %1105 = vmatprep.subr.mxu0 0.0
    %1106 = vmatpush1.msra.mxu0 0.0
    %1107 = vmatprep.subr.mxu0 0.0
    %1108 = vmatpush1.msra.mxu0 0.0
    %1109 = vmatprep.subr.mxu0 0.0
    %1110 = vmatpush1.msra.mxu0 0.0
    %1111 = vmatprep.subr.mxu0 0.0
    %1112 = vmatpush1.msra.mxu0 0.0
    %1113 = vmatprep.subr.mxu0 0.0
    %1114 = vmatpush1.msra.mxu0 0.0
    %1115 = vmatprep.mubr.f32.mxu0 0.0
    %1116 = vmatmul.mubr.f32.gmra.mrb[0].mxu0 %v167
    %v1117 = vpop.f32.mrb[0].mxu0
    %v1118 = vadd.f32 0.0, %v1117
    %v1119 = vpop.f32.mrb[0].mxu0
    %1120 = vdwg.mxu0
    %v1121 = vmul.f32 %v1118, 0.0625
    %v1122 = vmul.f32 %v1121, %v1121
    %1124 = vrot.lane.b32.xlu0 %v1122, 32
    %v1125 = vpop.permute.xlu0 %1124
    %v1127 = vsub.f32 %v1121, %v1125
    %v1128 = vmax.f32 %v1127, 0.0
    %s1129 = scalar_lea.vmem %s2, 4
    %v1130 = vld [vmem:[%s1129] sm:$0x1]
    %v1131 = vadd.f32 %v1128, 1e-05
    %v1132 = vrsqrt.pop %v1131
    %v1135 = vunpack.c.l.s4 1966171168
    %v1136 = vunpack.c.0.s8 %v1135
    %v1137 = vlaneseq
    %v1138 = vshrl.u32 %v1137, 7
    %v1139 = vsub.s32 %v1136, %v1138
    %v1140 = vrot.slane %v1132, %v1139
    %v1142 = vunpack.c.l.s4 1966171168
    %v1143 = vunpack.c.0.s8 %v1142
    %v1144 = vlaneseq
    %v1145 = vshrl.u32 %v1144, 7
    %v1146 = vsub.s32 %v1143, %v1145
    %v1147 = vrot.slane %v1140, %v1146
    %1148 = vrot.lane.b32.xlu0 %v1147, 96
    %v1149 = vpop.permute.xlu0 %1148
    %v1151 = vmul.f32 %v1130, %v1149
    %s1152 = scalar_lea.vmem %s3, 4
    %v1153 = vld [vmem:[%s1152] sm:$0x1]
    %v1154 = vmul.f32 %v1121, %v1151
    %v1155 = vsub.f32 %v1153, %v1154
    %v1157 = vlaneseq
    %v1158 = vshrl.u32 %v1157, 7
    %v1159 = vsub.s32 0, %v1158
    %v1160 = vrot.slane %v1151, %v1159
    %v1162 = vmul.f32 %v1031, %v1160
    %v1163 = vmul.f32 %v1036, %v1160
    %v1165 = vlaneseq
    %v1166 = vshrl.u32 %v1165, 7
    %v1167 = vsub.s32 0, %v1166
    %v1168 = vrot.slane %v1155, %v1167
    %v1170 = vadd.f32 %v1162, %v1168
    %v1171 = vadd.f32 %v1163, %v1168
    %v1172 = vmax.f32 %v1170, 0.0
    %v1173 = vmax.f32 %v1171, 0.0
    %v1174 = vld [vmem:[#allocation7] sm:$0xff]
    %v1175 = vld [vmem:[#allocation7 + $0x8] sm:$0xff]
    %v1176 = vld [vmem:[#allocation7 + $0x10] sm:$0xff]
    %v1177 = vld [vmem:[#allocation7 + $0x18] sm:$0xff]
    %v1178 = vld [vmem:[%s5] sm:$0x1]
    %v1180 = vlaneseq
    %v1181 = vshrl.u32 %v1180, 7
    %v1182 = vsub.s32 0, %v1181
    %v1183 = vrot.slane %v1178, %v1182
    %v1186 = vsel %vm71, %v1172, 0
    %v1189 = vsel %vm71, %v1173, 0
    %1191 = vmatprep.subr.mxu0 0.0
    %1192 = vmatpush1.msra.mxu0 %v1174
    %1193 = vmatprep.subr.mxu0 0.0
    %1194 = vmatpush1.msra.mxu0 %v1175
    %1195 = vmatprep.subr.mxu0 0.0
    %1196 = vmatpush1.msra.mxu0 %v1176
    %1197 = vmatprep.subr.mxu0 0.0
    %1198 = vmatpush1.msra.mxu0 %v1177
    %1199 = vmatprep.subr.mxu0 0.0
    %1200 = vmatpush1.msra.mxu0 0.0
    %1201 = vmatprep.subr.mxu0 0.0
    %1202 = vmatpush1.msra.mxu0 0.0
    %1203 = vmatprep.subr.mxu0 0.0
    %1204 = vmatpush1.msra.mxu0 0.0
    %1205 = vmatprep.subr.mxu0 0.0
    %1206 = vmatpush1.msra.mxu0 0.0
    %1207 = vmatprep.subr.mxu0 0.0
    %1208 = vmatpush1.msra.mxu0 0.0
    %1209 = vmatprep.subr.mxu0 0.0
    %1210 = vmatpush1.msra.mxu0 0.0
    %1211 = vmatprep.subr.mxu0 0.0
    %1212 = vmatpush1.msra.mxu0 0.0
    %1213 = vmatprep.subr.mxu0 0.0
    %1214 = vmatpush1.msra.mxu0 0.0
    %1215 = vmatprep.subr.mxu0 0.0
    %1216 = vmatpush1.msra.mxu0 0.0
    %1217 = vmatprep.subr.mxu0 0.0
    %1218 = vmatpush1.msra.mxu0 0.0
    %1219 = vmatprep.subr.mxu0 0.0
    %1220 = vmatpush1.msra.mxu0 0.0
    %1221 = vmatprep.subr.mxu0 0.0
    %1222 = vmatpush1.msra.mxu0 0.0
    %1223 = vmatprep.subr.mxu0 0.0
    %1224 = vmatpush1.msra.mxu0 0.0
    %1225 = vmatprep.subr.mxu0 0.0
    %1226 = vmatpush1.msra.mxu0 0.0
    %1227 = vmatprep.subr.mxu0 0.0
    %1228 = vmatpush1.msra.mxu0 0.0
    %1229 = vmatprep.subr.mxu0 0.0
    %1230 = vmatpush1.msra.mxu0 0.0
    %1231 = vmatprep.subr.mxu0 0.0
    %1232 = vmatpush1.msra.mxu0 0.0
    %1233 = vmatprep.subr.mxu0 0.0
    %1234 = vmatpush1.msra.mxu0 0.0
    %1235 = vmatprep.subr.mxu0 0.0
    %1236 = vmatpush1.msra.mxu0 0.0
    %1237 = vmatprep.subr.mxu0 0.0
    %1238 = vmatpush1.msra.mxu0 0.0
    %1239 = vmatprep.subr.mxu0 0.0
    %1240 = vmatpush1.msra.mxu0 0.0
    %1241 = vmatprep.subr.mxu0 0.0
    %1242 = vmatpush1.msra.mxu0 0.0
    %1243 = vmatprep.subr.mxu0 0.0
    %1244 = vmatpush1.msra.mxu0 0.0
    %1245 = vmatprep.subr.mxu0 0.0
    %1246 = vmatpush1.msra.mxu0 0.0
    %1247 = vmatprep.subr.mxu0 0.0
    %1248 = vmatpush1.msra.mxu0 0.0
    %1249 = vmatprep.subr.mxu0 0.0
    %1250 = vmatpush1.msra.mxu0 0.0
    %1251 = vmatprep.subr.mxu0 0.0
    %1252 = vmatpush1.msra.mxu0 0.0
    %1253 = vmatprep.subr.mxu0 0.0
    %1254 = vmatpush1.msra.mxu0 0.0
    %1255 = vmatprep.mubr.f32.mxu0 0.0
    %1256 = vmatmul.mubr.f32.gmra.mrb[0].mxu0 %v1186
    %v1257 = vpop.f32.mrb[0].mxu0
    %v1258 = vadd.f32 %v1183, %v1257
    %v1259 = vpop.f32.mrb[0].mxu0
    %1260 = vmatprep.mubr.f32.mxu0 0.0
    %1261 = vmatmul.mubr.f32.gmra.mrb[0].mxu0 %v1189
    %v1262 = vpop.f32.mrb[0].mxu0
    %v1263 = vadd.f32 %v1183, %v1262
    %v1264 = vpop.f32.mrb[0].mxu0
    %1265 = vdwg.mxu0
    %1266 = vst [vmem:[#allocation8] sm:$0xff] %v1258
    %1267 = vst [vmem:[#allocation8 + $0x8] sm:$0xff] %v1263
    // Predicated region
    $region38: #{graphdnet_forward.1} parent=1 // pred_check
      _
    $region39: #{graphdnet_forward.1} parent=1 // pred_check_branch
      %1269 = sbr.rel (0) target = $region41
    $region40: #{graphdnet_forward.1} parent=1 // pred_region
      %s1271 = ssub.s32 256, 256
      %1272 = vsyncadd [#allocation4], %s1271
      %s1273 = sshll.u32 [#allocation8], 4
      %s1274 = int_to_ptr.vmem [resolvable:$true] %s1273
      %1279 = dma.vmem_to_hbm [thread:$0]  %s1274, 256, %s6, [#allocation4], 128, 128, 8
    $region41: #{graphdnet_forward.1} parent=1 // pred_fallthru
      _
    // Predicated region
    $region42: #{graphdnet_forward.1} parent=1 // pred_check
      _
    $region43: #{graphdnet_forward.1} parent=1 // pred_check_branch
      %1281 = sbr.rel (0) target = $region45
    $region44: #{graphdnet_forward.1} parent=1 // pred_region
      %1282 = dma.done [#allocation4], 256
    $region45: #{graphdnet_forward.1} parent=1 // pred_fallthru
      _
    %1283 = vsyncpa [#allocation3], 1
    %1284 = vsyncpa [#allocation6], 1
    %1285 = vsyncpa [#allocation4], 1

</llo_original>
